<compile_context>
chip_gen: v7x
topology: tpu7x:2x2x1
jax: 0.10.0
libtpu: 0.0.40
codegen_flags: <defaults>
</compile_context>

<pallas_src>
import functools

import jax
import jax.numpy as jnp
from jax.experimental import pallas as pl
from jax.experimental.pallas import tpu as pltpu


def _round_up(v, m):
    return (v + m - 1) // m * m


def _mask_gather_sigmoid_kernel(n_masks, labels_ref, x_hbm, o_ref, buf, sem):
    """One grid step: gather B winning class planes, sigmoid, store a slab.

    labels_ref: SMEM int32 [N]           (scalar prefetch)
    x_hbm:      HBM ref    [N, C, HW]    (memory_space=pl.ANY, manual DMA)
    o_ref:      VMEM out   [B, HW_pad]   (lane-dense slab)
    buf:        VMEM       [2, B, HW]    (cross-step double buffer)
    sem:        DMA sems   [B, 2]
    """
    outer = pl.program_id(0)
    inner = pl.program_id(1)
    n_inner = pl.num_programs(1)
    blk = outer * n_inner + inner          # global block index
    b = buf.shape[1]                       # masks per step

    def start_block(block_idx, slot):
        base = block_idx * b
        for j in range(b):
            # Clamp the tail of the last block: duplicate reads, never OOB.
            row = jnp.minimum(base + j, n_masks - 1)
            cls = labels_ref[row]
            pltpu.make_async_copy(
                x_hbm.at[row, pl.ds(cls, 1)],      # (1, HW) selected class plane
                buf.at[slot, pl.ds(j, 1)],         # (1, HW) row of the slab
                sem.at[j, slot],
            ).start()

    cur_slot = inner & 1

    # Prime the pipeline at the start of each outer chunk (per-core safe).
    @pl.when(inner == 0)
    def _():
        start_block(blk, cur_slot)

    # Prefetch the next block into the other slot BEFORE any wait, so the SMEM
    # label reads stay ahead of the DMA waits and the gather overlaps this
    # step's compute + output writeback.
    @pl.when(inner + 1 < n_inner)
    def _():
        start_block(blk + 1, (inner + 1) & 1)

    # Wait for the current block's gather copies.
    for j in range(b):
        pltpu.make_async_copy(
            x_hbm.at[0, pl.ds(0, 1)],              # dummy src (shape only)
            buf.at[cur_slot, pl.ds(j, 1)],
            sem.at[j, cur_slot],
        ).wait()

    logits = buf[cur_slot].astype(jnp.float32)     # f32 compute (covers v5e bf16)
    # sigmoid(x) == 0.5 * tanh(0.5 * x) + 0.5  -> one EUP transcendental.
    probs = 0.5 * jnp.tanh(0.5 * logits) + 0.5
    if buf.shape[-1] != o_ref.shape[-1]:
        # Lane-pad to the 128-aligned output slab so the store is unmasked.
        pad = jnp.zeros(
            (probs.shape[0], o_ref.shape[-1] - probs.shape[-1]), probs.dtype
        )
        probs = jnp.concatenate([probs, pad], axis=-1)
    o_ref[...] = probs.astype(o_ref.dtype)


def _mask_prob_impl(x, labels):
    """Returns mask_prob[arange(N), labels][:, None] as [N, 1, H, W]."""
    N, C, H, W = x.shape
    HW = H * W
    HW_pad = _round_up(HW, 128)

    itemsize = jnp.dtype(x.dtype).itemsize
    pack = {4: 8, 2: 16, 1: 32}.get(itemsize, 8)   # sublane packing per dtype
    # ~N/4 masks per step (keeps >=2-4 blocks so v7x can shard the outer axis),
    # rounded to the sublane pack, capped at 128 rows.
    B = max(pack, min(128, _round_up(pl.cdiv(N, 4), pack)))

    n_blocks = pl.cdiv(N, B)
    n_outer = min(2, n_blocks)             # "parallel" axis for megacore (v7x)
    n_inner = pl.cdiv(n_blocks, n_outer)   # sequential, double-buffered axis
    n_rows_pad = n_outer * n_inner * B

    # Free reshape: each class plane is contiguous in NCHW, so flattening H,W
    # just makes the last (lane) axis dense.
    x_flat = x.reshape(N, C, HW)
    labels = labels.astype(jnp.int32)

    grid_spec = pltpu.PrefetchScalarGridSpec(
        num_scalar_prefetch=1,
        grid=(n_outer, n_inner),
        in_specs=[pl.BlockSpec(memory_space=pl.ANY)],   # x stays in HBM
        out_specs=pl.BlockSpec(
            (B, HW_pad), lambda o, i, labels_ref: (o * n_inner + i, 0)
        ),
        scratch_shapes=[
            pltpu.VMEM((2, B, HW), x.dtype),            # gather double buffer
            pltpu.SemaphoreType.DMA((B, 2)),
        ],
    )

    out = pl.pallas_call(
        functools.partial(_mask_gather_sigmoid_kernel, N),
        out_shape=jax.ShapeDtypeStruct((n_rows_pad, HW_pad), x.dtype),
        grid_spec=grid_spec,
        compiler_params=pltpu.CompilerParams(
            dimension_semantics=("parallel", "arbitrary"),
        ),
        cost_estimate=pl.CostEstimate(
            flops=4 * N * HW,
            transcendentals=N * HW,
            bytes_accessed=2 * N * HW * itemsize + N * 4,
        ),
    )(labels, x_flat)

    # Crop padding + reshape under the same jit (no extra wrapper HBM passes).
    return out[:N, :HW].reshape(N, 1, H, W)


_mask_prob = jax.jit(_mask_prob_impl)


def mask_post_process(x, labels, boxes_per_image):
    """x: [N, C, H, W] mask logits; labels: [N] int class ids.

    Returns a list (one entry per image) of [n_i, 1, H, W] mask probabilities,
    matching `mask_prob.split(boxes_per_image, dim=0)` in the PyTorch module.
    """
    N, _, H, W = x.shape
    if N == 0:  # degenerate case: no detections
        return [jnp.zeros((n, 1, H, W), x.dtype) for n in boxes_per_image]

    mask_prob = _mask_prob(x, labels)

    # Split per image (pure glue, mirrors torch.split on dim 0).
    results, start = [], 0
    for n in boxes_per_image:
        results.append(mask_prob[start:start + n])
        start += n
    # TODO(synk): BoxList construction / field copying / optional masker are
    # Python object glue with no tensor compute; only the 'mask' field tensors
    # are returned here.
    return results


def _reference(x, labels, boxes_per_image):
    prob = jax.nn.sigmoid(x)
    n = x.shape[0]
    gathered = prob[jnp.arange(n), labels][:, None]
    out, start = [], 0
    for k in boxes_per_image:
        out.append(gathered[start:start + k])
        start += k
    return out


def _run_case(key, N, C, H, W, boxes_per_image):
    k1, k2 = jax.random.split(key)
    x = jax.random.normal(k1, (N, C, H, W), dtype=jnp.float32)
    labels = jax.random.randint(k2, (N,), 0, C, dtype=jnp.int32)

    outs = mask_post_process(x, labels, boxes_per_image)
    outs = [jax.block_until_ready(o) for o in outs]

    refs = _reference(x, labels, boxes_per_image)
    for o, r in zip(outs, refs):
        assert o.shape == r.shape, (o.shape, r.shape)
        assert jnp.allclose(o, r, atol=1e-5, rtol=1e-5)


if __name__ == "__main__":
    key = jax.random.PRNGKey(0)
    ka, kb = jax.random.split(key)

    # Small case (single block, prime-only path).
    _run_case(ka, N=6, C=4, H=16, W=16, boxes_per_image=[2, 4])

    # Larger case: exercises cross-step double-buffering, the 2-wide parallel
    # outer axis, tail clamping and padded blocks.
    _run_case(kb, N=40, C=4, H=16, W=16, boxes_per_image=[10, 25, 5])

    print("KERNEL_OK")
</pallas_src>

<mosaic_0001>
module attributes {stable_mosaic.version = 11 : i64} {
  func.func @_mask_gather_sigmoid_kernel(%arg0: i32, %arg1: i32, %arg2: memref<6xi32, #tpu.memory_space<smem>>, %arg3: memref<6x4x256xf32, #tpu.memory_space<any>>, %arg4: memref<8x256xf32, #tpu.memory_space<vmem>>, %arg5: memref<2x8x256xf32, #tpu.memory_space<vmem>>, %arg6: memref<8x2x!tpu.dma_semaphore, #tpu.memory_space<semaphore_mem>>) attributes {dimension_semantics = [#tpu.dimension_semantics<parallel>, #tpu.dimension_semantics<arbitrary>], iteration_bounds = array<i64: 1, 1>, scalar_prefetch = 1 : i64, scratch_operands = 2 : i64, tpu.core_type = #tpu.core_type<tc>, window_params = [{}, {transform_indices = @transform_1, window_bounds = array<i64: 8, 256>}]} {
    %c1_i32 = arith.constant 1 : i32
    %0 = arith.muli %arg0, %c1_i32 : i32
    %1 = arith.addi %0, %arg1 : i32
    %c1_i32_0 = arith.constant 1 : i32
    %2 = arith.andi %arg1, %c1_i32_0 : i32
    %c0_i32 = arith.constant 0 : i32
    %3 = arith.cmpi eq, %arg1, %c0_i32 : i32
    %4 = arith.extui %3 : i1 to i32
    %c0_i32_1 = arith.constant 0 : i32
    %5 = arith.cmpi ne, %4, %c0_i32_1 : i32
    scf.if %5 {
      %c8_i32 = arith.constant 8 : i32
      %69 = arith.muli %1, %c8_i32 : i32
      %c0_i32_52 = arith.constant 0 : i32
      %70 = arith.addi %69, %c0_i32_52 : i32
      %c5_i32_53 = arith.constant 5 : i32
      %71 = arith.minsi %70, %c5_i32_53 : i32
      %72 = arith.index_cast %71 : i32 to index
      %73 = memref.load %arg2[%72] : memref<6xi32, #tpu.memory_space<smem>>
      %c0_i32_54 = arith.constant 0 : i32
      %c0_i32_55 = arith.constant 0 : i32
      %74 = tpu.memref_slice %arg3[%71, %73, %c0_i32_55] : memref<6x4x256xf32, #tpu.memory_space<any>> -> memref<1x1x256xf32, #tpu.memory_space<any>>
      %75 = tpu.memref_squeeze %74 : memref<1x1x256xf32, #tpu.memory_space<any>> -> memref<1x256xf32, #tpu.memory_space<any>>
      %c0_i32_56 = arith.constant 0 : i32
      %c0_i32_57 = arith.constant 0 : i32
      %76 = tpu.memref_slice %arg5[%2, %c0_i32_56, %c0_i32_57] : memref<2x8x256xf32, #tpu.memory_space<vmem>> -> memref<1x1x256xf32, #tpu.memory_space<vmem>>
      %77 = tpu.memref_squeeze %76 : memref<1x1x256xf32, #tpu.memory_space<vmem>> -> memref<1x256xf32, #tpu.memory_space<vmem>>
      %78 = tpu.memref_slice %arg6[%c0_i32_54, %2] : memref<8x2x!tpu.dma_semaphore, #tpu.memory_space<semaphore_mem>> -> memref<1x1x!tpu.dma_semaphore, #tpu.memory_space<semaphore_mem>>
      %79 = tpu.memref_squeeze %78 : memref<1x1x!tpu.dma_semaphore, #tpu.memory_space<semaphore_mem>> -> memref<!tpu.dma_semaphore, #tpu.memory_space<semaphore_mem>>
      tpu.enqueue_dma source(%75 : memref<1x256xf32, #tpu.memory_space<any>>) target(%77 : memref<1x256xf32, #tpu.memory_space<vmem>>) target_semaphore(%79 : memref<!tpu.dma_semaphore, #tpu.memory_space<semaphore_mem>>)
      %c1_i32_58 = arith.constant 1 : i32
      %80 = arith.addi %69, %c1_i32_58 : i32
      %c5_i32_59 = arith.constant 5 : i32
      %81 = arith.minsi %80, %c5_i32_59 : i32
      %82 = arith.index_cast %81 : i32 to index
      %83 = memref.load %arg2[%82] : memref<6xi32, #tpu.memory_space<smem>>
      %c1_i32_60 = arith.constant 1 : i32
      %c0_i32_61 = arith.constant 0 : i32
      %84 = tpu.memref_slice %arg3[%81, %83, %c0_i32_61] : memref<6x4x256xf32, #tpu.memory_space<any>> -> memref<1x1x256xf32, #tpu.memory_space<any>>
      %85 = tpu.memref_squeeze %84 : memref<1x1x256xf32, #tpu.memory_space<any>> -> memref<1x256xf32, #tpu.memory_space<any>>
      %c1_i32_62 = arith.constant 1 : i32
      %c0_i32_63 = arith.constant 0 : i32
      %86 = tpu.memref_slice %arg5[%2, %c1_i32_62, %c0_i32_63] : memref<2x8x256xf32, #tpu.memory_space<vmem>> -> memref<1x1x256xf32, #tpu.memory_space<vmem>>
      %87 = tpu.memref_squeeze %86 : memref<1x1x256xf32, #tpu.memory_space<vmem>> -> memref<1x256xf32, #tpu.memory_space<vmem>>
      %88 = tpu.memref_slice %arg6[%c1_i32_60, %2] : memref<8x2x!tpu.dma_semaphore, #tpu.memory_space<semaphore_mem>> -> memref<1x1x!tpu.dma_semaphore, #tpu.memory_space<semaphore_mem>>
      %89 = tpu.memref_squeeze %88 : memref<1x1x!tpu.dma_semaphore, #tpu.memory_space<semaphore_mem>> -> memref<!tpu.dma_semaphore, #tpu.memory_space<semaphore_mem>>
      tpu.enqueue_dma source(%85 : memref<1x256xf32, #tpu.memory_space<any>>) target(%87 : memref<1x256xf32, #tpu.memory_space<vmem>>) target_semaphore(%89 : memref<!tpu.dma_semaphore, #tpu.memory_space<semaphore_mem>>)
      %c2_i32_64 = arith.constant 2 : i32
      %90 = arith.addi %69, %c2_i32_64 : i32
      %c5_i32_65 = arith.constant 5 : i32
      %91 = arith.minsi %90, %c5_i32_65 : i32
      %92 = arith.index_cast %91 : i32 to index
      %93 = memref.load %arg2[%92] : memref<6xi32, #tpu.memory_space<smem>>
      %c2_i32_66 = arith.constant 2 : i32
      %c0_i32_67 = arith.constant 0 : i32
      %94 = tpu.memref_slice %arg3[%91, %93, %c0_i32_67] : memref<6x4x256xf32, #tpu.memory_space<any>> -> memref<1x1x256xf32, #tpu.memory_space<any>>
      %95 = tpu.memref_squeeze %94 : memref<1x1x256xf32, #tpu.memory_space<any>> -> memref<1x256xf32, #tpu.memory_space<any>>
      %c2_i32_68 = arith.constant 2 : i32
      %c0_i32_69 = arith.constant 0 : i32
      %96 = tpu.memref_slice %arg5[%2, %c2_i32_68, %c0_i32_69] : memref<2x8x256xf32, #tpu.memory_space<vmem>> -> memref<1x1x256xf32, #tpu.memory_space<vmem>>
      %97 = tpu.memref_squeeze %96 : memref<1x1x256xf32, #tpu.memory_space<vmem>> -> memref<1x256xf32, #tpu.memory_space<vmem>>
      %98 = tpu.memref_slice %arg6[%c2_i32_66, %2] : memref<8x2x!tpu.dma_semaphore, #tpu.memory_space<semaphore_mem>> -> memref<1x1x!tpu.dma_semaphore, #tpu.memory_space<semaphore_mem>>
      %99 = tpu.memref_squeeze %98 : memref<1x1x!tpu.dma_semaphore, #tpu.memory_space<semaphore_mem>> -> memref<!tpu.dma_semaphore, #tpu.memory_space<semaphore_mem>>
      tpu.enqueue_dma source(%95 : memref<1x256xf32, #tpu.memory_space<any>>) target(%97 : memref<1x256xf32, #tpu.memory_space<vmem>>) target_semaphore(%99 : memref<!tpu.dma_semaphore, #tpu.memory_space<semaphore_mem>>)
      %c3_i32_70 = arith.constant 3 : i32
      %100 = arith.addi %69, %c3_i32_70 : i32
      %c5_i32_71 = arith.constant 5 : i32
      %101 = arith.minsi %100, %c5_i32_71 : i32
      %102 = arith.index_cast %101 : i32 to index
      %103 = memref.load %arg2[%102] : memref<6xi32, #tpu.memory_space<smem>>
      %c3_i32_72 = arith.constant 3 : i32
      %c0_i32_73 = arith.constant 0 : i32
      %104 = tpu.memref_slice %arg3[%101, %103, %c0_i32_73] : memref<6x4x256xf32, #tpu.memory_space<any>> -> memref<1x1x256xf32, #tpu.memory_space<any>>
      %105 = tpu.memref_squeeze %104 : memref<1x1x256xf32, #tpu.memory_space<any>> -> memref<1x256xf32, #tpu.memory_space<any>>
      %c3_i32_74 = arith.constant 3 : i32
      %c0_i32_75 = arith.constant 0 : i32
      %106 = tpu.memref_slice %arg5[%2, %c3_i32_74, %c0_i32_75] : memref<2x8x256xf32, #tpu.memory_space<vmem>> -> memref<1x1x256xf32, #tpu.memory_space<vmem>>
      %107 = tpu.memref_squeeze %106 : memref<1x1x256xf32, #tpu.memory_space<vmem>> -> memref<1x256xf32, #tpu.memory_space<vmem>>
      %108 = tpu.memref_slice %arg6[%c3_i32_72, %2] : memref<8x2x!tpu.dma_semaphore, #tpu.memory_space<semaphore_mem>> -> memref<1x1x!tpu.dma_semaphore, #tpu.memory_space<semaphore_mem>>
      %109 = tpu.memref_squeeze %108 : memref<1x1x!tpu.dma_semaphore, #tpu.memory_space<semaphore_mem>> -> memref<!tpu.dma_semaphore, #tpu.memory_space<semaphore_mem>>
      tpu.enqueue_dma source(%105 : memref<1x256xf32, #tpu.memory_space<any>>) target(%107 : memref<1x256xf32, #tpu.memory_space<vmem>>) target_semaphore(%109 : memref<!tpu.dma_semaphore, #tpu.memory_space<semaphore_mem>>)
      %c4_i32_76 = arith.constant 4 : i32
      %110 = arith.addi %69, %c4_i32_76 : i32
      %c5_i32_77 = arith.constant 5 : i32
      %111 = arith.minsi %110, %c5_i32_77 : i32
      %112 = arith.index_cast %111 : i32 to index
      %113 = memref.load %arg2[%112] : memref<6xi32, #tpu.memory_space<smem>>
      %c4_i32_78 = arith.constant 4 : i32
      %c0_i32_79 = arith.constant 0 : i32
      %114 = tpu.memref_slice %arg3[%111, %113, %c0_i32_79] : memref<6x4x256xf32, #tpu.memory_space<any>> -> memref<1x1x256xf32, #tpu.memory_space<any>>
      %115 = tpu.memref_squeeze %114 : memref<1x1x256xf32, #tpu.memory_space<any>> -> memref<1x256xf32, #tpu.memory_space<any>>
      %c4_i32_80 = arith.constant 4 : i32
      %c0_i32_81 = arith.constant 0 : i32
      %116 = tpu.memref_slice %arg5[%2, %c4_i32_80, %c0_i32_81] : memref<2x8x256xf32, #tpu.memory_space<vmem>> -> memref<1x1x256xf32, #tpu.memory_space<vmem>>
      %117 = tpu.memref_squeeze %116 : memref<1x1x256xf32, #tpu.memory_space<vmem>> -> memref<1x256xf32, #tpu.memory_space<vmem>>
      %118 = tpu.memref_slice %arg6[%c4_i32_78, %2] : memref<8x2x!tpu.dma_semaphore, #tpu.memory_space<semaphore_mem>> -> memref<1x1x!tpu.dma_semaphore, #tpu.memory_space<semaphore_mem>>
      %119 = tpu.memref_squeeze %118 : memref<1x1x!tpu.dma_semaphore, #tpu.memory_space<semaphore_mem>> -> memref<!tpu.dma_semaphore, #tpu.memory_space<semaphore_mem>>
      tpu.enqueue_dma source(%115 : memref<1x256xf32, #tpu.memory_space<any>>) target(%117 : memref<1x256xf32, #tpu.memory_space<vmem>>) target_semaphore(%119 : memref<!tpu.dma_semaphore, #tpu.memory_space<semaphore_mem>>)
      %c5_i32_82 = arith.constant 5 : i32
      %120 = arith.addi %69, %c5_i32_82 : i32
      %c5_i32_83 = arith.constant 5 : i32
      %121 = arith.minsi %120, %c5_i32_83 : i32
      %122 = arith.index_cast %121 : i32 to index
      %123 = memref.load %arg2[%122] : memref<6xi32, #tpu.memory_space<smem>>
      %c5_i32_84 = arith.constant 5 : i32
      %c0_i32_85 = arith.constant 0 : i32
      %124 = tpu.memref_slice %arg3[%121, %123, %c0_i32_85] : memref<6x4x256xf32, #tpu.memory_space<any>> -> memref<1x1x256xf32, #tpu.memory_space<any>>
      %125 = tpu.memref_squeeze %124 : memref<1x1x256xf32, #tpu.memory_space<any>> -> memref<1x256xf32, #tpu.memory_space<any>>
      %c5_i32_86 = arith.constant 5 : i32
      %c0_i32_87 = arith.constant 0 : i32
      %126 = tpu.memref_slice %arg5[%2, %c5_i32_86, %c0_i32_87] : memref<2x8x256xf32, #tpu.memory_space<vmem>> -> memref<1x1x256xf32, #tpu.memory_space<vmem>>
      %127 = tpu.memref_squeeze %126 : memref<1x1x256xf32, #tpu.memory_space<vmem>> -> memref<1x256xf32, #tpu.memory_space<vmem>>
      %128 = tpu.memref_slice %arg6[%c5_i32_84, %2] : memref<8x2x!tpu.dma_semaphore, #tpu.memory_space<semaphore_mem>> -> memref<1x1x!tpu.dma_semaphore, #tpu.memory_space<semaphore_mem>>
      %129 = tpu.memref_squeeze %128 : memref<1x1x!tpu.dma_semaphore, #tpu.memory_space<semaphore_mem>> -> memref<!tpu.dma_semaphore, #tpu.memory_space<semaphore_mem>>
      tpu.enqueue_dma source(%125 : memref<1x256xf32, #tpu.memory_space<any>>) target(%127 : memref<1x256xf32, #tpu.memory_space<vmem>>) target_semaphore(%129 : memref<!tpu.dma_semaphore, #tpu.memory_space<semaphore_mem>>)
      %c6_i32_88 = arith.constant 6 : i32
      %130 = arith.addi %69, %c6_i32_88 : i32
      %c5_i32_89 = arith.constant 5 : i32
      %131 = arith.minsi %130, %c5_i32_89 : i32
      %132 = arith.index_cast %131 : i32 to index
      %133 = memref.load %arg2[%132] : memref<6xi32, #tpu.memory_space<smem>>
      %c6_i32_90 = arith.constant 6 : i32
      %c0_i32_91 = arith.constant 0 : i32
      %134 = tpu.memref_slice %arg3[%131, %133, %c0_i32_91] : memref<6x4x256xf32, #tpu.memory_space<any>> -> memref<1x1x256xf32, #tpu.memory_space<any>>
      %135 = tpu.memref_squeeze %134 : memref<1x1x256xf32, #tpu.memory_space<any>> -> memref<1x256xf32, #tpu.memory_space<any>>
      %c6_i32_92 = arith.constant 6 : i32
      %c0_i32_93 = arith.constant 0 : i32
      %136 = tpu.memref_slice %arg5[%2, %c6_i32_92, %c0_i32_93] : memref<2x8x256xf32, #tpu.memory_space<vmem>> -> memref<1x1x256xf32, #tpu.memory_space<vmem>>
      %137 = tpu.memref_squeeze %136 : memref<1x1x256xf32, #tpu.memory_space<vmem>> -> memref<1x256xf32, #tpu.memory_space<vmem>>
      %138 = tpu.memref_slice %arg6[%c6_i32_90, %2] : memref<8x2x!tpu.dma_semaphore, #tpu.memory_space<semaphore_mem>> -> memref<1x1x!tpu.dma_semaphore, #tpu.memory_space<semaphore_mem>>
      %139 = tpu.memref_squeeze %138 : memref<1x1x!tpu.dma_semaphore, #tpu.memory_space<semaphore_mem>> -> memref<!tpu.dma_semaphore, #tpu.memory_space<semaphore_mem>>
      tpu.enqueue_dma source(%135 : memref<1x256xf32, #tpu.memory_space<any>>) target(%137 : memref<1x256xf32, #tpu.memory_space<vmem>>) target_semaphore(%139 : memref<!tpu.dma_semaphore, #tpu.memory_space<semaphore_mem>>)
      %c7_i32_94 = arith.constant 7 : i32
      %140 = arith.addi %69, %c7_i32_94 : i32
      %c5_i32_95 = arith.constant 5 : i32
      %141 = arith.minsi %140, %c5_i32_95 : i32
      %142 = arith.index_cast %141 : i32 to index
      %143 = memref.load %arg2[%142] : memref<6xi32, #tpu.memory_space<smem>>
      %c7_i32_96 = arith.constant 7 : i32
      %c0_i32_97 = arith.constant 0 : i32
      %144 = tpu.memref_slice %arg3[%141, %143, %c0_i32_97] : memref<6x4x256xf32, #tpu.memory_space<any>> -> memref<1x1x256xf32, #tpu.memory_space<any>>
      %145 = tpu.memref_squeeze %144 : memref<1x1x256xf32, #tpu.memory_space<any>> -> memref<1x256xf32, #tpu.memory_space<any>>
      %c7_i32_98 = arith.constant 7 : i32
      %c0_i32_99 = arith.constant 0 : i32
      %146 = tpu.memref_slice %arg5[%2, %c7_i32_98, %c0_i32_99] : memref<2x8x256xf32, #tpu.memory_space<vmem>> -> memref<1x1x256xf32, #tpu.memory_space<vmem>>
      %147 = tpu.memref_squeeze %146 : memref<1x1x256xf32, #tpu.memory_space<vmem>> -> memref<1x256xf32, #tpu.memory_space<vmem>>
      %148 = tpu.memref_slice %arg6[%c7_i32_96, %2] : memref<8x2x!tpu.dma_semaphore, #tpu.memory_space<semaphore_mem>> -> memref<1x1x!tpu.dma_semaphore, #tpu.memory_space<semaphore_mem>>
      %149 = tpu.memref_squeeze %148 : memref<1x1x!tpu.dma_semaphore, #tpu.memory_space<semaphore_mem>> -> memref<!tpu.dma_semaphore, #tpu.memory_space<semaphore_mem>>
      tpu.enqueue_dma source(%145 : memref<1x256xf32, #tpu.memory_space<any>>) target(%147 : memref<1x256xf32, #tpu.memory_space<vmem>>) target_semaphore(%149 : memref<!tpu.dma_semaphore, #tpu.memory_space<semaphore_mem>>)
    } else {
    }
    %c1_i32_2 = arith.constant 1 : i32
    %6 = arith.addi %arg1, %c1_i32_2 : i32
    %c1_i32_3 = arith.constant 1 : i32
    %7 = arith.cmpi slt, %6, %c1_i32_3 : i32
    %8 = arith.extui %7 : i1 to i32
    %c0_i32_4 = arith.constant 0 : i32
    %9 = arith.cmpi ne, %8, %c0_i32_4 : i32
    scf.if %9 {
      %c1_i32_52 = arith.constant 1 : i32
      %69 = arith.addi %1, %c1_i32_52 : i32
      %c1_i32_53 = arith.constant 1 : i32
      %70 = arith.addi %arg1, %c1_i32_53 : i32
      %c1_i32_54 = arith.constant 1 : i32
      %71 = arith.andi %70, %c1_i32_54 : i32
      %c8_i32 = arith.constant 8 : i32
      %72 = arith.muli %69, %c8_i32 : i32
      %c0_i32_55 = arith.constant 0 : i32
      %73 = arith.addi %72, %c0_i32_55 : i32
      %c5_i32_56 = arith.constant 5 : i32
      %74 = arith.minsi %73, %c5_i32_56 : i32
      %75 = arith.index_cast %74 : i32 to index
      %76 = memref.load %arg2[%75] : memref<6xi32, #tpu.memory_space<smem>>
      %c0_i32_57 = arith.constant 0 : i32
      %c0_i32_58 = arith.constant 0 : i32
      %77 = tpu.memref_slice %arg3[%74, %76, %c0_i32_58] : memref<6x4x256xf32, #tpu.memory_space<any>> -> memref<1x1x256xf32, #tpu.memory_space<any>>
      %78 = tpu.memref_squeeze %77 : memref<1x1x256xf32, #tpu.memory_space<any>> -> memref<1x256xf32, #tpu.memory_space<any>>
      %c0_i32_59 = arith.constant 0 : i32
      %c0_i32_60 = arith.constant 0 : i32
      %79 = tpu.memref_slice %arg5[%71, %c0_i32_59, %c0_i32_60] : memref<2x8x256xf32, #tpu.memory_space<vmem>> -> memref<1x1x256xf32, #tpu.memory_space<vmem>>
      %80 = tpu.memref_squeeze %79 : memref<1x1x256xf32, #tpu.memory_space<vmem>> -> memref<1x256xf32, #tpu.memory_space<vmem>>
      %81 = tpu.memref_slice %arg6[%c0_i32_57, %71] : memref<8x2x!tpu.dma_semaphore, #tpu.memory_space<semaphore_mem>> -> memref<1x1x!tpu.dma_semaphore, #tpu.memory_space<semaphore_mem>>
      %82 = tpu.memref_squeeze %81 : memref<1x1x!tpu.dma_semaphore, #tpu.memory_space<semaphore_mem>> -> memref<!tpu.dma_semaphore, #tpu.memory_space<semaphore_mem>>
      tpu.enqueue_dma source(%78 : memref<1x256xf32, #tpu.memory_space<any>>) target(%80 : memref<1x256xf32, #tpu.memory_space<vmem>>) target_semaphore(%82 : memref<!tpu.dma_semaphore, #tpu.memory_space<semaphore_mem>>)
      %c1_i32_61 = arith.constant 1 : i32
      %83 = arith.addi %72, %c1_i32_61 : i32
      %c5_i32_62 = arith.constant 5 : i32
      %84 = arith.minsi %83, %c5_i32_62 : i32
      %85 = arith.index_cast %84 : i32 to index
      %86 = memref.load %arg2[%85] : memref<6xi32, #tpu.memory_space<smem>>
      %c1_i32_63 = arith.constant 1 : i32
      %c0_i32_64 = arith.constant 0 : i32
      %87 = tpu.memref_slice %arg3[%84, %86, %c0_i32_64] : memref<6x4x256xf32, #tpu.memory_space<any>> -> memref<1x1x256xf32, #tpu.memory_space<any>>
      %88 = tpu.memref_squeeze %87 : memref<1x1x256xf32, #tpu.memory_space<any>> -> memref<1x256xf32, #tpu.memory_space<any>>
      %c1_i32_65 = arith.constant 1 : i32
      %c0_i32_66 = arith.constant 0 : i32
      %89 = tpu.memref_slice %arg5[%71, %c1_i32_65, %c0_i32_66] : memref<2x8x256xf32, #tpu.memory_space<vmem>> -> memref<1x1x256xf32, #tpu.memory_space<vmem>>
      %90 = tpu.memref_squeeze %89 : memref<1x1x256xf32, #tpu.memory_space<vmem>> -> memref<1x256xf32, #tpu.memory_space<vmem>>
      %91 = tpu.memref_slice %arg6[%c1_i32_63, %71] : memref<8x2x!tpu.dma_semaphore, #tpu.memory_space<semaphore_mem>> -> memref<1x1x!tpu.dma_semaphore, #tpu.memory_space<semaphore_mem>>
      %92 = tpu.memref_squeeze %91 : memref<1x1x!tpu.dma_semaphore, #tpu.memory_space<semaphore_mem>> -> memref<!tpu.dma_semaphore, #tpu.memory_space<semaphore_mem>>
      tpu.enqueue_dma source(%88 : memref<1x256xf32, #tpu.memory_space<any>>) target(%90 : memref<1x256xf32, #tpu.memory_space<vmem>>) target_semaphore(%92 : memref<!tpu.dma_semaphore, #tpu.memory_space<semaphore_mem>>)
      %c2_i32_67 = arith.constant 2 : i32
      %93 = arith.addi %72, %c2_i32_67 : i32
      %c5_i32_68 = arith.constant 5 : i32
      %94 = arith.minsi %93, %c5_i32_68 : i32
      %95 = arith.index_cast %94 : i32 to index
      %96 = memref.load %arg2[%95] : memref<6xi32, #tpu.memory_space<smem>>
      %c2_i32_69 = arith.constant 2 : i32
      %c0_i32_70 = arith.constant 0 : i32
      %97 = tpu.memref_slice %arg3[%94, %96, %c0_i32_70] : memref<6x4x256xf32, #tpu.memory_space<any>> -> memref<1x1x256xf32, #tpu.memory_space<any>>
      %98 = tpu.memref_squeeze %97 : memref<1x1x256xf32, #tpu.memory_space<any>> -> memref<1x256xf32, #tpu.memory_space<any>>
      %c2_i32_71 = arith.constant 2 : i32
      %c0_i32_72 = arith.constant 0 : i32
      %99 = tpu.memref_slice %arg5[%71, %c2_i32_71, %c0_i32_72] : memref<2x8x256xf32, #tpu.memory_space<vmem>> -> memref<1x1x256xf32, #tpu.memory_space<vmem>>
      %100 = tpu.memref_squeeze %99 : memref<1x1x256xf32, #tpu.memory_space<vmem>> -> memref<1x256xf32, #tpu.memory_space<vmem>>
      %101 = tpu.memref_slice %arg6[%c2_i32_69, %71] : memref<8x2x!tpu.dma_semaphore, #tpu.memory_space<semaphore_mem>> -> memref<1x1x!tpu.dma_semaphore, #tpu.memory_space<semaphore_mem>>
      %102 = tpu.memref_squeeze %101 : memref<1x1x!tpu.dma_semaphore, #tpu.memory_space<semaphore_mem>> -> memref<!tpu.dma_semaphore, #tpu.memory_space<semaphore_mem>>
      tpu.enqueue_dma source(%98 : memref<1x256xf32, #tpu.memory_space<any>>) target(%100 : memref<1x256xf32, #tpu.memory_space<vmem>>) target_semaphore(%102 : memref<!tpu.dma_semaphore, #tpu.memory_space<semaphore_mem>>)
      %c3_i32_73 = arith.constant 3 : i32
      %103 = arith.addi %72, %c3_i32_73 : i32
      %c5_i32_74 = arith.constant 5 : i32
      %104 = arith.minsi %103, %c5_i32_74 : i32
      %105 = arith.index_cast %104 : i32 to index
      %106 = memref.load %arg2[%105] : memref<6xi32, #tpu.memory_space<smem>>
      %c3_i32_75 = arith.constant 3 : i32
      %c0_i32_76 = arith.constant 0 : i32
      %107 = tpu.memref_slice %arg3[%104, %106, %c0_i32_76] : memref<6x4x256xf32, #tpu.memory_space<any>> -> memref<1x1x256xf32, #tpu.memory_space<any>>
      %108 = tpu.memref_squeeze %107 : memref<1x1x256xf32, #tpu.memory_space<any>> -> memref<1x256xf32, #tpu.memory_space<any>>
      %c3_i32_77 = arith.constant 3 : i32
      %c0_i32_78 = arith.constant 0 : i32
      %109 = tpu.memref_slice %arg5[%71, %c3_i32_77, %c0_i32_78] : memref<2x8x256xf32, #tpu.memory_space<vmem>> -> memref<1x1x256xf32, #tpu.memory_space<vmem>>
      %110 = tpu.memref_squeeze %109 : memref<1x1x256xf32, #tpu.memory_space<vmem>> -> memref<1x256xf32, #tpu.memory_space<vmem>>
      %111 = tpu.memref_slice %arg6[%c3_i32_75, %71] : memref<8x2x!tpu.dma_semaphore, #tpu.memory_space<semaphore_mem>> -> memref<1x1x!tpu.dma_semaphore, #tpu.memory_space<semaphore_mem>>
      %112 = tpu.memref_squeeze %111 : memref<1x1x!tpu.dma_semaphore, #tpu.memory_space<semaphore_mem>> -> memref<!tpu.dma_semaphore, #tpu.memory_space<semaphore_mem>>
      tpu.enqueue_dma source(%108 : memref<1x256xf32, #tpu.memory_space<any>>) target(%110 : memref<1x256xf32, #tpu.memory_space<vmem>>) target_semaphore(%112 : memref<!tpu.dma_semaphore, #tpu.memory_space<semaphore_mem>>)
      %c4_i32_79 = arith.constant 4 : i32
      %113 = arith.addi %72, %c4_i32_79 : i32
      %c5_i32_80 = arith.constant 5 : i32
      %114 = arith.minsi %113, %c5_i32_80 : i32
      %115 = arith.index_cast %114 : i32 to index
      %116 = memref.load %arg2[%115] : memref<6xi32, #tpu.memory_space<smem>>
      %c4_i32_81 = arith.constant 4 : i32
      %c0_i32_82 = arith.constant 0 : i32
      %117 = tpu.memref_slice %arg3[%114, %116, %c0_i32_82] : memref<6x4x256xf32, #tpu.memory_space<any>> -> memref<1x1x256xf32, #tpu.memory_space<any>>
      %118 = tpu.memref_squeeze %117 : memref<1x1x256xf32, #tpu.memory_space<any>> -> memref<1x256xf32, #tpu.memory_space<any>>
      %c4_i32_83 = arith.constant 4 : i32
      %c0_i32_84 = arith.constant 0 : i32
      %119 = tpu.memref_slice %arg5[%71, %c4_i32_83, %c0_i32_84] : memref<2x8x256xf32, #tpu.memory_space<vmem>> -> memref<1x1x256xf32, #tpu.memory_space<vmem>>
      %120 = tpu.memref_squeeze %119 : memref<1x1x256xf32, #tpu.memory_space<vmem>> -> memref<1x256xf32, #tpu.memory_space<vmem>>
      %121 = tpu.memref_slice %arg6[%c4_i32_81, %71] : memref<8x2x!tpu.dma_semaphore, #tpu.memory_space<semaphore_mem>> -> memref<1x1x!tpu.dma_semaphore, #tpu.memory_space<semaphore_mem>>
      %122 = tpu.memref_squeeze %121 : memref<1x1x!tpu.dma_semaphore, #tpu.memory_space<semaphore_mem>> -> memref<!tpu.dma_semaphore, #tpu.memory_space<semaphore_mem>>
      tpu.enqueue_dma source(%118 : memref<1x256xf32, #tpu.memory_space<any>>) target(%120 : memref<1x256xf32, #tpu.memory_space<vmem>>) target_semaphore(%122 : memref<!tpu.dma_semaphore, #tpu.memory_space<semaphore_mem>>)
      %c5_i32_85 = arith.constant 5 : i32
      %123 = arith.addi %72, %c5_i32_85 : i32
      %c5_i32_86 = arith.constant 5 : i32
      %124 = arith.minsi %123, %c5_i32_86 : i32
      %125 = arith.index_cast %124 : i32 to index
      %126 = memref.load %arg2[%125] : memref<6xi32, #tpu.memory_space<smem>>
      %c5_i32_87 = arith.constant 5 : i32
      %c0_i32_88 = arith.constant 0 : i32
      %127 = tpu.memref_slice %arg3[%124, %126, %c0_i32_88] : memref<6x4x256xf32, #tpu.memory_space<any>> -> memref<1x1x256xf32, #tpu.memory_space<any>>
      %128 = tpu.memref_squeeze %127 : memref<1x1x256xf32, #tpu.memory_space<any>> -> memref<1x256xf32, #tpu.memory_space<any>>
      %c5_i32_89 = arith.constant 5 : i32
      %c0_i32_90 = arith.constant 0 : i32
      %129 = tpu.memref_slice %arg5[%71, %c5_i32_89, %c0_i32_90] : memref<2x8x256xf32, #tpu.memory_space<vmem>> -> memref<1x1x256xf32, #tpu.memory_space<vmem>>
      %130 = tpu.memref_squeeze %129 : memref<1x1x256xf32, #tpu.memory_space<vmem>> -> memref<1x256xf32, #tpu.memory_space<vmem>>
      %131 = tpu.memref_slice %arg6[%c5_i32_87, %71] : memref<8x2x!tpu.dma_semaphore, #tpu.memory_space<semaphore_mem>> -> memref<1x1x!tpu.dma_semaphore, #tpu.memory_space<semaphore_mem>>
      %132 = tpu.memref_squeeze %131 : memref<1x1x!tpu.dma_semaphore, #tpu.memory_space<semaphore_mem>> -> memref<!tpu.dma_semaphore, #tpu.memory_space<semaphore_mem>>
      tpu.enqueue_dma source(%128 : memref<1x256xf32, #tpu.memory_space<any>>) target(%130 : memref<1x256xf32, #tpu.memory_space<vmem>>) target_semaphore(%132 : memref<!tpu.dma_semaphore, #tpu.memory_space<semaphore_mem>>)
      %c6_i32_91 = arith.constant 6 : i32
      %133 = arith.addi %72, %c6_i32_91 : i32
      %c5_i32_92 = arith.constant 5 : i32
      %134 = arith.minsi %133, %c5_i32_92 : i32
      %135 = arith.index_cast %134 : i32 to index
      %136 = memref.load %arg2[%135] : memref<6xi32, #tpu.memory_space<smem>>
      %c6_i32_93 = arith.constant 6 : i32
      %c0_i32_94 = arith.constant 0 : i32
      %137 = tpu.memref_slice %arg3[%134, %136, %c0_i32_94] : memref<6x4x256xf32, #tpu.memory_space<any>> -> memref<1x1x256xf32, #tpu.memory_space<any>>
      %138 = tpu.memref_squeeze %137 : memref<1x1x256xf32, #tpu.memory_space<any>> -> memref<1x256xf32, #tpu.memory_space<any>>
      %c6_i32_95 = arith.constant 6 : i32
      %c0_i32_96 = arith.constant 0 : i32
      %139 = tpu.memref_slice %arg5[%71, %c6_i32_95, %c0_i32_96] : memref<2x8x256xf32, #tpu.memory_space<vmem>> -> memref<1x1x256xf32, #tpu.memory_space<vmem>>
      %140 = tpu.memref_squeeze %139 : memref<1x1x256xf32, #tpu.memory_space<vmem>> -> memref<1x256xf32, #tpu.memory_space<vmem>>
      %141 = tpu.memref_slice %arg6[%c6_i32_93, %71] : memref<8x2x!tpu.dma_semaphore, #tpu.memory_space<semaphore_mem>> -> memref<1x1x!tpu.dma_semaphore, #tpu.memory_space<semaphore_mem>>
      %142 = tpu.memref_squeeze %141 : memref<1x1x!tpu.dma_semaphore, #tpu.memory_space<semaphore_mem>> -> memref<!tpu.dma_semaphore, #tpu.memory_space<semaphore_mem>>
      tpu.enqueue_dma source(%138 : memref<1x256xf32, #tpu.memory_space<any>>) target(%140 : memref<1x256xf32, #tpu.memory_space<vmem>>) target_semaphore(%142 : memref<!tpu.dma_semaphore, #tpu.memory_space<semaphore_mem>>)
      %c7_i32_97 = arith.constant 7 : i32
      %143 = arith.addi %72, %c7_i32_97 : i32
      %c5_i32_98 = arith.constant 5 : i32
      %144 = arith.minsi %143, %c5_i32_98 : i32
      %145 = arith.index_cast %144 : i32 to index
      %146 = memref.load %arg2[%145] : memref<6xi32, #tpu.memory_space<smem>>
      %c7_i32_99 = arith.constant 7 : i32
      %c0_i32_100 = arith.constant 0 : i32
      %147 = tpu.memref_slice %arg3[%144, %146, %c0_i32_100] : memref<6x4x256xf32, #tpu.memory_space<any>> -> memref<1x1x256xf32, #tpu.memory_space<any>>
      %148 = tpu.memref_squeeze %147 : memref<1x1x256xf32, #tpu.memory_space<any>> -> memref<1x256xf32, #tpu.memory_space<any>>
      %c7_i32_101 = arith.constant 7 : i32
      %c0_i32_102 = arith.constant 0 : i32
      %149 = tpu.memref_slice %arg5[%71, %c7_i32_101, %c0_i32_102] : memref<2x8x256xf32, #tpu.memory_space<vmem>> -> memref<1x1x256xf32, #tpu.memory_space<vmem>>
      %150 = tpu.memref_squeeze %149 : memref<1x1x256xf32, #tpu.memory_space<vmem>> -> memref<1x256xf32, #tpu.memory_space<vmem>>
      %151 = tpu.memref_slice %arg6[%c7_i32_99, %71] : memref<8x2x!tpu.dma_semaphore, #tpu.memory_space<semaphore_mem>> -> memref<1x1x!tpu.dma_semaphore, #tpu.memory_space<semaphore_mem>>
      %152 = tpu.memref_squeeze %151 : memref<1x1x!tpu.dma_semaphore, #tpu.memory_space<semaphore_mem>> -> memref<!tpu.dma_semaphore, #tpu.memory_space<semaphore_mem>>
      tpu.enqueue_dma source(%148 : memref<1x256xf32, #tpu.memory_space<any>>) target(%150 : memref<1x256xf32, #tpu.memory_space<vmem>>) target_semaphore(%152 : memref<!tpu.dma_semaphore, #tpu.memory_space<semaphore_mem>>)
    } else {
    }
    %c0_i32_5 = arith.constant 0 : i32
    %c0_i32_6 = arith.constant 0 : i32
    %c0_i32_7 = arith.constant 0 : i32
    %c0_i32_8 = arith.constant 0 : i32
    %10 = tpu.memref_slice %arg3[%c0_i32_5, %c0_i32_7, %c0_i32_8] : memref<6x4x256xf32, #tpu.memory_space<any>> -> memref<1x1x256xf32, #tpu.memory_space<any>>
    %11 = tpu.memref_squeeze %10 : memref<1x1x256xf32, #tpu.memory_space<any>> -> memref<1x256xf32, #tpu.memory_space<any>>
    %c0_i32_9 = arith.constant 0 : i32
    %c0_i32_10 = arith.constant 0 : i32
    %12 = tpu.memref_slice %arg5[%2, %c0_i32_9, %c0_i32_10] : memref<2x8x256xf32, #tpu.memory_space<vmem>> -> memref<1x1x256xf32, #tpu.memory_space<vmem>>
    %13 = tpu.memref_squeeze %12 : memref<1x1x256xf32, #tpu.memory_space<vmem>> -> memref<1x256xf32, #tpu.memory_space<vmem>>
    %14 = tpu.memref_slice %arg6[%c0_i32_6, %2] : memref<8x2x!tpu.dma_semaphore, #tpu.memory_space<semaphore_mem>> -> memref<1x1x!tpu.dma_semaphore, #tpu.memory_space<semaphore_mem>>
    %15 = tpu.memref_squeeze %14 : memref<1x1x!tpu.dma_semaphore, #tpu.memory_space<semaphore_mem>> -> memref<!tpu.dma_semaphore, #tpu.memory_space<semaphore_mem>>
    tpu.wait_dma2 semaphore(%15 : memref<!tpu.dma_semaphore, #tpu.memory_space<semaphore_mem>>) src(%11 : memref<1x256xf32, #tpu.memory_space<any>>) dst(%13 : memref<1x256xf32, #tpu.memory_space<vmem>>)
    %c0_i32_11 = arith.constant 0 : i32
    %c1_i32_12 = arith.constant 1 : i32
    %c0_i32_13 = arith.constant 0 : i32
    %c0_i32_14 = arith.constant 0 : i32
    %16 = tpu.memref_slice %arg3[%c0_i32_11, %c0_i32_13, %c0_i32_14] : memref<6x4x256xf32, #tpu.memory_space<any>> -> memref<1x1x256xf32, #tpu.memory_space<any>>
    %17 = tpu.memref_squeeze %16 : memref<1x1x256xf32, #tpu.memory_space<any>> -> memref<1x256xf32, #tpu.memory_space<any>>
    %c1_i32_15 = arith.constant 1 : i32
    %c0_i32_16 = arith.constant 0 : i32
    %18 = tpu.memref_slice %arg5[%2, %c1_i32_15, %c0_i32_16] : memref<2x8x256xf32, #tpu.memory_space<vmem>> -> memref<1x1x256xf32, #tpu.memory_space<vmem>>
    %19 = tpu.memref_squeeze %18 : memref<1x1x256xf32, #tpu.memory_space<vmem>> -> memref<1x256xf32, #tpu.memory_space<vmem>>
    %20 = tpu.memref_slice %arg6[%c1_i32_12, %2] : memref<8x2x!tpu.dma_semaphore, #tpu.memory_space<semaphore_mem>> -> memref<1x1x!tpu.dma_semaphore, #tpu.memory_space<semaphore_mem>>
    %21 = tpu.memref_squeeze %20 : memref<1x1x!tpu.dma_semaphore, #tpu.memory_space<semaphore_mem>> -> memref<!tpu.dma_semaphore, #tpu.memory_space<semaphore_mem>>
    tpu.wait_dma2 semaphore(%21 : memref<!tpu.dma_semaphore, #tpu.memory_space<semaphore_mem>>) src(%17 : memref<1x256xf32, #tpu.memory_space<any>>) dst(%19 : memref<1x256xf32, #tpu.memory_space<vmem>>)
    %c0_i32_17 = arith.constant 0 : i32
    %c2_i32 = arith.constant 2 : i32
    %c0_i32_18 = arith.constant 0 : i32
    %c0_i32_19 = arith.constant 0 : i32
    %22 = tpu.memref_slice %arg3[%c0_i32_17, %c0_i32_18, %c0_i32_19] : memref<6x4x256xf32, #tpu.memory_space<any>> -> memref<1x1x256xf32, #tpu.memory_space<any>>
    %23 = tpu.memref_squeeze %22 : memref<1x1x256xf32, #tpu.memory_space<any>> -> memref<1x256xf32, #tpu.memory_space<any>>
    %c2_i32_20 = arith.constant 2 : i32
    %c0_i32_21 = arith.constant 0 : i32
    %24 = tpu.memref_slice %arg5[%2, %c2_i32_20, %c0_i32_21] : memref<2x8x256xf32, #tpu.memory_space<vmem>> -> memref<1x1x256xf32, #tpu.memory_space<vmem>>
    %25 = tpu.memref_squeeze %24 : memref<1x1x256xf32, #tpu.memory_space<vmem>> -> memref<1x256xf32, #tpu.memory_space<vmem>>
    %26 = tpu.memref_slice %arg6[%c2_i32, %2] : memref<8x2x!tpu.dma_semaphore, #tpu.memory_space<semaphore_mem>> -> memref<1x1x!tpu.dma_semaphore, #tpu.memory_space<semaphore_mem>>
    %27 = tpu.memref_squeeze %26 : memref<1x1x!tpu.dma_semaphore, #tpu.memory_space<semaphore_mem>> -> memref<!tpu.dma_semaphore, #tpu.memory_space<semaphore_mem>>
    tpu.wait_dma2 semaphore(%27 : memref<!tpu.dma_semaphore, #tpu.memory_space<semaphore_mem>>) src(%23 : memref<1x256xf32, #tpu.memory_space<any>>) dst(%25 : memref<1x256xf32, #tpu.memory_space<vmem>>)
    %c0_i32_22 = arith.constant 0 : i32
    %c3_i32 = arith.constant 3 : i32
    %c0_i32_23 = arith.constant 0 : i32
    %c0_i32_24 = arith.constant 0 : i32
    %28 = tpu.memref_slice %arg3[%c0_i32_22, %c0_i32_23, %c0_i32_24] : memref<6x4x256xf32, #tpu.memory_space<any>> -> memref<1x1x256xf32, #tpu.memory_space<any>>
    %29 = tpu.memref_squeeze %28 : memref<1x1x256xf32, #tpu.memory_space<any>> -> memref<1x256xf32, #tpu.memory_space<any>>
    %c3_i32_25 = arith.constant 3 : i32
    %c0_i32_26 = arith.constant 0 : i32
    %30 = tpu.memref_slice %arg5[%2, %c3_i32_25, %c0_i32_26] : memref<2x8x256xf32, #tpu.memory_space<vmem>> -> memref<1x1x256xf32, #tpu.memory_space<vmem>>
    %31 = tpu.memref_squeeze %30 : memref<1x1x256xf32, #tpu.memory_space<vmem>> -> memref<1x256xf32, #tpu.memory_space<vmem>>
    %32 = tpu.memref_slice %arg6[%c3_i32, %2] : memref<8x2x!tpu.dma_semaphore, #tpu.memory_space<semaphore_mem>> -> memref<1x1x!tpu.dma_semaphore, #tpu.memory_space<semaphore_mem>>
    %33 = tpu.memref_squeeze %32 : memref<1x1x!tpu.dma_semaphore, #tpu.memory_space<semaphore_mem>> -> memref<!tpu.dma_semaphore, #tpu.memory_space<semaphore_mem>>
    tpu.wait_dma2 semaphore(%33 : memref<!tpu.dma_semaphore, #tpu.memory_space<semaphore_mem>>) src(%29 : memref<1x256xf32, #tpu.memory_space<any>>) dst(%31 : memref<1x256xf32, #tpu.memory_space<vmem>>)
    %c0_i32_27 = arith.constant 0 : i32
    %c4_i32 = arith.constant 4 : i32
    %c0_i32_28 = arith.constant 0 : i32
    %c0_i32_29 = arith.constant 0 : i32
    %34 = tpu.memref_slice %arg3[%c0_i32_27, %c0_i32_28, %c0_i32_29] : memref<6x4x256xf32, #tpu.memory_space<any>> -> memref<1x1x256xf32, #tpu.memory_space<any>>
    %35 = tpu.memref_squeeze %34 : memref<1x1x256xf32, #tpu.memory_space<any>> -> memref<1x256xf32, #tpu.memory_space<any>>
    %c4_i32_30 = arith.constant 4 : i32
    %c0_i32_31 = arith.constant 0 : i32
    %36 = tpu.memref_slice %arg5[%2, %c4_i32_30, %c0_i32_31] : memref<2x8x256xf32, #tpu.memory_space<vmem>> -> memref<1x1x256xf32, #tpu.memory_space<vmem>>
    %37 = tpu.memref_squeeze %36 : memref<1x1x256xf32, #tpu.memory_space<vmem>> -> memref<1x256xf32, #tpu.memory_space<vmem>>
    %38 = tpu.memref_slice %arg6[%c4_i32, %2] : memref<8x2x!tpu.dma_semaphore, #tpu.memory_space<semaphore_mem>> -> memref<1x1x!tpu.dma_semaphore, #tpu.memory_space<semaphore_mem>>
    %39 = tpu.memref_squeeze %38 : memref<1x1x!tpu.dma_semaphore, #tpu.memory_space<semaphore_mem>> -> memref<!tpu.dma_semaphore, #tpu.memory_space<semaphore_mem>>
    tpu.wait_dma2 semaphore(%39 : memref<!tpu.dma_semaphore, #tpu.memory_space<semaphore_mem>>) src(%35 : memref<1x256xf32, #tpu.memory_space<any>>) dst(%37 : memref<1x256xf32, #tpu.memory_space<vmem>>)
    %c0_i32_32 = arith.constant 0 : i32
    %c5_i32 = arith.constant 5 : i32
    %c0_i32_33 = arith.constant 0 : i32
    %c0_i32_34 = arith.constant 0 : i32
    %40 = tpu.memref_slice %arg3[%c0_i32_32, %c0_i32_33, %c0_i32_34] : memref<6x4x256xf32, #tpu.memory_space<any>> -> memref<1x1x256xf32, #tpu.memory_space<any>>
    %41 = tpu.memref_squeeze %40 : memref<1x1x256xf32, #tpu.memory_space<any>> -> memref<1x256xf32, #tpu.memory_space<any>>
    %c5_i32_35 = arith.constant 5 : i32
    %c0_i32_36 = arith.constant 0 : i32
    %42 = tpu.memref_slice %arg5[%2, %c5_i32_35, %c0_i32_36] : memref<2x8x256xf32, #tpu.memory_space<vmem>> -> memref<1x1x256xf32, #tpu.memory_space<vmem>>
    %43 = tpu.memref_squeeze %42 : memref<1x1x256xf32, #tpu.memory_space<vmem>> -> memref<1x256xf32, #tpu.memory_space<vmem>>
    %44 = tpu.memref_slice %arg6[%c5_i32, %2] : memref<8x2x!tpu.dma_semaphore, #tpu.memory_space<semaphore_mem>> -> memref<1x1x!tpu.dma_semaphore, #tpu.memory_space<semaphore_mem>>
    %45 = tpu.memref_squeeze %44 : memref<1x1x!tpu.dma_semaphore, #tpu.memory_space<semaphore_mem>> -> memref<!tpu.dma_semaphore, #tpu.memory_space<semaphore_mem>>
    tpu.wait_dma2 semaphore(%45 : memref<!tpu.dma_semaphore, #tpu.memory_space<semaphore_mem>>) src(%41 : memref<1x256xf32, #tpu.memory_space<any>>) dst(%43 : memref<1x256xf32, #tpu.memory_space<vmem>>)
    %c0_i32_37 = arith.constant 0 : i32
    %c6_i32 = arith.constant 6 : i32
    %c0_i32_38 = arith.constant 0 : i32
    %c0_i32_39 = arith.constant 0 : i32
    %46 = tpu.memref_slice %arg3[%c0_i32_37, %c0_i32_38, %c0_i32_39] : memref<6x4x256xf32, #tpu.memory_space<any>> -> memref<1x1x256xf32, #tpu.memory_space<any>>
    %47 = tpu.memref_squeeze %46 : memref<1x1x256xf32, #tpu.memory_space<any>> -> memref<1x256xf32, #tpu.memory_space<any>>
    %c6_i32_40 = arith.constant 6 : i32
    %c0_i32_41 = arith.constant 0 : i32
    %48 = tpu.memref_slice %arg5[%2, %c6_i32_40, %c0_i32_41] : memref<2x8x256xf32, #tpu.memory_space<vmem>> -> memref<1x1x256xf32, #tpu.memory_space<vmem>>
    %49 = tpu.memref_squeeze %48 : memref<1x1x256xf32, #tpu.memory_space<vmem>> -> memref<1x256xf32, #tpu.memory_space<vmem>>
    %50 = tpu.memref_slice %arg6[%c6_i32, %2] : memref<8x2x!tpu.dma_semaphore, #tpu.memory_space<semaphore_mem>> -> memref<1x1x!tpu.dma_semaphore, #tpu.memory_space<semaphore_mem>>
    %51 = tpu.memref_squeeze %50 : memref<1x1x!tpu.dma_semaphore, #tpu.memory_space<semaphore_mem>> -> memref<!tpu.dma_semaphore, #tpu.memory_space<semaphore_mem>>
    tpu.wait_dma2 semaphore(%51 : memref<!tpu.dma_semaphore, #tpu.memory_space<semaphore_mem>>) src(%47 : memref<1x256xf32, #tpu.memory_space<any>>) dst(%49 : memref<1x256xf32, #tpu.memory_space<vmem>>)
    %c0_i32_42 = arith.constant 0 : i32
    %c7_i32 = arith.constant 7 : i32
    %c0_i32_43 = arith.constant 0 : i32
    %c0_i32_44 = arith.constant 0 : i32
    %52 = tpu.memref_slice %arg3[%c0_i32_42, %c0_i32_43, %c0_i32_44] : memref<6x4x256xf32, #tpu.memory_space<any>> -> memref<1x1x256xf32, #tpu.memory_space<any>>
    %53 = tpu.memref_squeeze %52 : memref<1x1x256xf32, #tpu.memory_space<any>> -> memref<1x256xf32, #tpu.memory_space<any>>
    %c7_i32_45 = arith.constant 7 : i32
    %c0_i32_46 = arith.constant 0 : i32
    %54 = tpu.memref_slice %arg5[%2, %c7_i32_45, %c0_i32_46] : memref<2x8x256xf32, #tpu.memory_space<vmem>> -> memref<1x1x256xf32, #tpu.memory_space<vmem>>
    %55 = tpu.memref_squeeze %54 : memref<1x1x256xf32, #tpu.memory_space<vmem>> -> memref<1x256xf32, #tpu.memory_space<vmem>>
    %56 = tpu.memref_slice %arg6[%c7_i32, %2] : memref<8x2x!tpu.dma_semaphore, #tpu.memory_space<semaphore_mem>> -> memref<1x1x!tpu.dma_semaphore, #tpu.memory_space<semaphore_mem>>
    %57 = tpu.memref_squeeze %56 : memref<1x1x!tpu.dma_semaphore, #tpu.memory_space<semaphore_mem>> -> memref<!tpu.dma_semaphore, #tpu.memory_space<semaphore_mem>>
    tpu.wait_dma2 semaphore(%57 : memref<!tpu.dma_semaphore, #tpu.memory_space<semaphore_mem>>) src(%53 : memref<1x256xf32, #tpu.memory_space<any>>) dst(%55 : memref<1x256xf32, #tpu.memory_space<vmem>>)
    %58 = arith.index_cast %2 : i32 to index
    %c0 = arith.constant 0 : index
    %c0_47 = arith.constant 0 : index
    %59 = vector.load %arg5[%58, %c0, %c0_47] : memref<2x8x256xf32, #tpu.memory_space<vmem>>, vector<1x8x256xf32>
    %60 = vector.shape_cast %59 : vector<1x8x256xf32> to vector<8x256xf32>
    %cst = arith.constant 5.000000e-01 : f32
    %61 = vector.broadcast %cst : f32 to vector<8x256xf32>
    %62 = arith.mulf %61, %60 : vector<8x256xf32>
    %63 = math.tanh %62 : vector<8x256xf32>
    %cst_48 = arith.constant 5.000000e-01 : f32
    %64 = vector.broadcast %cst_48 : f32 to vector<8x256xf32>
    %65 = arith.mulf %64, %63 : vector<8x256xf32>
    %cst_49 = arith.constant 5.000000e-01 : f32
    %66 = vector.broadcast %cst_49 : f32 to vector<8x256xf32>
    %67 = arith.addf %65, %66 : vector<8x256xf32>
    %c0_50 = arith.constant 0 : index
    %c0_51 = arith.constant 0 : index
    %68 = vector.load %arg4[%c0_50, %c0_51] : memref<8x256xf32, #tpu.memory_space<vmem>>, vector<8x256xf32>
    tpu.vector_store %arg4[%c0_50, %c0_51], %67 {strides = array<i32>} : memref<8x256xf32, #tpu.memory_space<vmem>>, vector<8x256xf32>,
    return
  }
  func.func @transform_1(%arg0: i32, %arg1: i32, %arg2: memref<6xi32, #tpu.memory_space<smem>>) -> (i32, i32) {
    %c1_i32 = arith.constant 1 : i32
    %0 = arith.muli %arg0, %c1_i32 : i32
    %1 = arith.addi %0, %arg1 : i32
    %c0_i32 = arith.constant 0 : i32
    %c0_i32_0 = arith.constant 0 : i32
    return %1, %c0_i32 : i32, i32
  }
}

</mosaic_0001>

<llo_original>
// kernel: _mask_prob_impl.1
$region0: #{_mask_prob_impl.1}
  #allocation0 [shape = 'u32[]', space=smem, size = 0x4, offset = 0x4, fixed_abs, tag = 'smem constant byte address 0x4 - core index']
  #allocation1 [shape = 'u32[144,128]{1,0:T(1,128)}', space=vmem, size = 0x12000, scoped, tag = 'internal scratch']
  #allocation2 [shape = 'f32[2,8,256]{2,1,0:T(8,128)}', space=vmem, size = 0x4000, scoped, tag = 'scratch operand']
  #allocation3 [shape = 's32[16]{0}', space=sflag, size = 0x40, scoped, tag = 'scratch operand']
  #allocation4 [shape = 's32[1]{0}', space=sflag, size = 0x4, scoped, tag = 'scoped memory for _mask_prob_impl.1']
  #allocation5 [shape = 'u8[512]{0}', space=smem, size = 0x200, scoped, tag = 'prefetched SMEM operand 0']
  #allocation6 [shape = 's32[]', space=sflag, size = 0x4, offset = 0, fixed_abs, tag = 'sflag constant byte address 0x0 - dummy sync flag']
  #allocation7 [shape = 's32[]', space=sflag, size = 0x4, offset = 0, fixed_abs, tag = 'sflag constant byte address 0x0 - dummy sync flag']
  #allocation8 [shape = 's32[]', space=sflag, size = 0x4, offset = 0, fixed_abs, tag = 'sflag constant byte address 0x0 - dummy sync flag']
  #allocation9 [shape = 's32[]', space=sflag, size = 0x4, offset = 0, fixed_abs, tag = 'sflag constant byte address 0x0 - dummy sync flag']
  #allocation10 [shape = 's32[]', space=sflag, size = 0x4, offset = 0, fixed_abs, tag = 'sflag constant byte address 0x0 - dummy sync flag']
  #allocation11 [shape = 's32[]', space=sflag, size = 0x4, offset = 0, fixed_abs, tag = 'sflag constant byte address 0x0 - dummy sync flag']
  #allocation12 [shape = 's32[]', space=sflag, size = 0x4, offset = 0, fixed_abs, tag = 'sflag constant byte address 0x0 - dummy sync flag']
  #allocation13 [shape = 's32[]', space=sflag, size = 0x4, offset = 0, fixed_abs, tag = 'sflag constant byte address 0x0 - dummy sync flag']
  #allocation14 [shape = 's32[]', space=sflag, size = 0x4, offset = 0, fixed_abs, tag = 'sflag constant byte address 0x0 - dummy sync flag']
  #allocation15 [shape = 's32[]', space=sflag, size = 0x4, offset = 0, fixed_abs, tag = 'sflag constant byte address 0x0 - dummy sync flag']
  #allocation16 [shape = 's32[]', space=sflag, size = 0x4, offset = 0, fixed_abs, tag = 'sflag constant byte address 0x0 - dummy sync flag']
  #allocation17 [shape = 's32[]', space=sflag, size = 0x4, offset = 0, fixed_abs, tag = 'sflag constant byte address 0x0 - dummy sync flag']
  #allocation18 [shape = 's32[]', space=sflag, size = 0x4, offset = 0, fixed_abs, tag = 'sflag constant byte address 0x0 - dummy sync flag']
  #allocation19 [shape = 's32[]', space=sflag, size = 0x4, offset = 0, fixed_abs, tag = 'sflag constant byte address 0x0 - dummy sync flag']
  #allocation20 [shape = 's32[]', space=sflag, size = 0x4, offset = 0, fixed_abs, tag = 'sflag constant byte address 0x0 - dummy sync flag']
  #allocation21 [shape = 's32[]', space=sflag, size = 0x4, offset = 0, fixed_abs, tag = 'sflag constant byte address 0x0 - dummy sync flag']
  %s0 = inlined_call_operand.vmem [shape: s32[6], index: 0, kind: input, shape index: {}]
  %s1 = inlined_call_operand.vmem [shape: f32[6,4,256], index: 1, kind: input, shape index: {}]
  %s2 = inlined_call_operand.vmem [shape: f32[8,256], index: 2, kind: output, shape index: {}]
  %s3 = sld [smem:[#allocation0]]
  $region498: #{_mask_prob_impl.1} parent=0
    _
  %s5 = ssub.s32 1, %s3
  %s6 = scalar_select 0, %s5, %s3
  %s7 = sshll.u32 %s0, 4
  %s8 = int_to_ptr.vmem [resolvable:$true] %s7
  %10 = dma.vmem_to_smem %s8, 16, [#allocation5], [#allocation4]
  %11 = dma.done [#allocation4], 16
  %12 = sfence
  %s13 = sadd.s32 0, 0
  %p14 = scmp.lt.s32.totalorder %s13, 0
  %s15 = scalar_select %p14, %s13, 0
  %s16 = smul.addr %s15, 2
  %s17 = smul.addr %s16, 8
  %s18 = scalar_lea.vmem %s2, %s17
  %s19 = sadd.s32 0, 0
  %p20 = scmp.lt.s32.totalorder %s19, 0
  %s21 = scalar_select %p20, %s19, 0
  %s22 = smul.addr %s21, 2
  %s23 = smul.addr %s22, 8
  %s24 = scalar_lea.vmem %s2, %s23
  %s25 = sadd.s32 0, 0
  %s26 = sadd.s32 0, 0
  %s27 = sand.u32 0, 1
  %p28 = scmp.eq.s32.totalorder 0, 0
  // Predicated region
  $region2: #{_mask_prob_impl.1} parent=0 // pred_check
    %p29 = pneg %p28
  $region3: #{_mask_prob_impl.1} parent=0 // pred_check_branch
    %31 = sbr.rel (%p29) target = $region5
  $region4: #{_mask_prob_impl.1} parent=0 // pred_region
    %s32 = smul.u32 %s26, 8
    %p33 = scmp.lt.s32.totalorder %s32, 5
    %s34 = scalar_select %p33, %s32, 5
    %s35 = sld [smem:[#allocation5 + %s34]]
    %s36 = sshrl.u32 %s35, 2
    %s37 = sand.u32 %s35, 3
    %s38 = smul.u32 %s36, 8
    %s39 = sadd.s32 %s37, %s38
    %s40 = smul.u32 %s34, 8
    %s41 = sadd.s32 %s39, %s40
    %s42 = scalar_lea.vmem %s1, %s41
    %s43 = smul.u32 %s27, 16
    %s44 = scalar_lea.vmem [#allocation2], %s43
    %s45 = scalar_lea.sflag [#allocation3], %s27
    %p47 = scmp.lt.u32.totalorder 1, 8
    %p48 = pneg %p47
    // Predicated region
    $region6: #{_mask_prob_impl.1} parent=4 // pred_check
      _
    $region7: #{_mask_prob_impl.1} parent=4 // pred_check_branch
      %50 = sbr.rel (%p47) target = $region9
    $region8: #{_mask_prob_impl.1} parent=4 // pred_region
      %s67 = sand.u32 1, 7
      %p68 = scmp.eq.s32.totalorder %s67, 0
      %p69 = pneg %p68
      // Predicated region
      $region21: #{_mask_prob_impl.1} parent=8 // pred_check
        _
      $region22: #{_mask_prob_impl.1} parent=8 // pred_check_branch
        %71 = sbr.rel (%p68) target = $region24
      $region23: #{_mask_prob_impl.1} parent=8 // pred_region
        %s72 = sand.u32 1, 7
        %s73 = ssub.s32 1, %s72
        %s74 = scalar_lea.vmem %s42, %s73
        %s75 = ssub.s32 1, %s72
        %s76 = scalar_lea.vmem %s44, %s75 [#allocation2]
        %s77 = sshllo.u32 0, %s72
        loop: start=0, step=1, limit=1
        $region25: #{_mask_prob_impl.1} parent=23 // loop_pre_header
          _
        $region26: #{_mask_prob_impl.1} parent=23 // loop_header
          %s79 = sphi 0, %s83
          %p80 = scmp.ge.s32.totalorder %s79, 1
          %s84 = sphi %s74, %s74
          %s85 = sphi %s76, %s76
        $region27: #{_mask_prob_impl.1} parent=23 // loop_header_branch
          %82 = sbr.rel (%p80) target = $region31
        $region28: #{_mask_prob_impl.1} parent=23 // loop_body
          %v86 = vld [vmem:[%s84] sm:%s77]
          %87 = vst [vmem:[%s85] sm:%s77] %v86
          %v88 = vld [vmem:[%s84 + $0x4] sm:%s77]
          %89 = vst [vmem:[%s85 + $0x8] sm:%s77] %v88
        $region29: #{_mask_prob_impl.1} parent=23 // loop_footer
          %s83 = sadd.s32 1, %s79
        $region30: #{_mask_prob_impl.1} parent=23 // loop_footer_branch
          %78 = sbr.rel target = $region26
        $region31: #{_mask_prob_impl.1} parent=23 // loop_exit
          _
      $region24: #{_mask_prob_impl.1} parent=8 // pred_fallthru
        _
    $region9: #{_mask_prob_impl.1} parent=4 // pred_fallthru
      _
    // Predicated region
    $region10: #{_mask_prob_impl.1} parent=4 // pred_check
      %p51 = pneg %p47
    $region11: #{_mask_prob_impl.1} parent=4 // pred_check_branch
      %53 = sbr.rel (%p51) target = $region13
    $region12: #{_mask_prob_impl.1} parent=4 // pred_region
      %s54 = sshllo.u32 0, 1
      loop: start=0, step=1, limit=1
      $region14: #{_mask_prob_impl.1} parent=12 // loop_pre_header
        _
      $region15: #{_mask_prob_impl.1} parent=12 // loop_header
        %s56 = sphi 0, %s60
        %p57 = scmp.ge.s32.totalorder %s56, 1
        %s61 = sphi %s42, %s42
        %s62 = sphi %s44, %s44
      $region16: #{_mask_prob_impl.1} parent=12 // loop_header_branch
        %59 = sbr.rel (%p57) target = $region20
      $region17: #{_mask_prob_impl.1} parent=12 // loop_body
        %v63 = vld [vmem:[%s61] sm:%s54]
        %64 = vst [vmem:[%s62] sm:%s54] %v63
        %v65 = vld [vmem:[%s61 + $0x4] sm:%s54]
        %66 = vst [vmem:[%s62 + $0x8] sm:%s54] %v65
      $region18: #{_mask_prob_impl.1} parent=12 // loop_footer
        %s60 = sadd.s32 1, %s56
      $region19: #{_mask_prob_impl.1} parent=12 // loop_footer_branch
        %55 = sbr.rel target = $region15
      $region20: #{_mask_prob_impl.1} parent=12 // loop_exit
        _
    $region13: #{_mask_prob_impl.1} parent=4 // pred_fallthru
      _
    // Predicated region
    $region32: #{_mask_prob_impl.1} parent=4 // pred_check
      _
    $region33: #{_mask_prob_impl.1} parent=4 // pred_check_branch
      %92 = sbr.rel (0) target = $region35
    $region34: #{_mask_prob_impl.1} parent=4 // pred_region
      %93 = vsyncadd %s45, 32
    $region35: #{_mask_prob_impl.1} parent=4 // pred_fallthru
      _
    %s94 = sadd.s32 %s32, 1
    %p95 = scmp.lt.s32.totalorder %s94, 5
    %s96 = scalar_select %p95, %s94, 5
    %s97 = sld [smem:[#allocation5 + %s96]]
    %s98 = sshrl.u32 %s97, 2
    %s99 = sand.u32 %s97, 3
    %s100 = smul.u32 %s98, 8
    %s101 = sadd.s32 %s99, %s100
    %s102 = smul.u32 %s96, 8
    %s103 = sadd.s32 %s101, %s102
    %s104 = scalar_lea.vmem %s1, %s103
    %s105 = sadd.s32 1, %s43
    %s106 = scalar_lea.vmem [#allocation2], %s105
    %s107 = sadd.s32 %s27, 2
    %s108 = scalar_lea.sflag [#allocation3], %s107
    %p110 = scmp.lt.u32.totalorder 1, 8
    %p111 = pneg %p110
    // Predicated region
    $region36: #{_mask_prob_impl.1} parent=4 // pred_check
      _
    $region37: #{_mask_prob_impl.1} parent=4 // pred_check_branch
      %113 = sbr.rel (%p110) target = $region39
    $region38: #{_mask_prob_impl.1} parent=4 // pred_region
      %s130 = sand.u32 1, 7
      %p131 = scmp.eq.s32.totalorder %s130, 0
      %p132 = pneg %p131
      // Predicated region
      $region51: #{_mask_prob_impl.1} parent=38 // pred_check
        _
      $region52: #{_mask_prob_impl.1} parent=38 // pred_check_branch
        %134 = sbr.rel (%p131) target = $region54
      $region53: #{_mask_prob_impl.1} parent=38 // pred_region
        %s135 = sand.u32 1, 7
        %s136 = ssub.s32 1, %s135
        %s137 = scalar_lea.vmem %s104, %s136
        %s138 = ssub.s32 1, %s135
        %s139 = scalar_lea.vmem %s106, %s138 [#allocation2]
        %s140 = sshllo.u32 0, %s135
        loop: start=0, step=1, limit=1
        $region55: #{_mask_prob_impl.1} parent=53 // loop_pre_header
          _
        $region56: #{_mask_prob_impl.1} parent=53 // loop_header
          %s142 = sphi 0, %s146
          %p143 = scmp.ge.s32.totalorder %s142, 1
          %s147 = sphi %s137, %s137
          %s148 = sphi %s139, %s139
        $region57: #{_mask_prob_impl.1} parent=53 // loop_header_branch
          %145 = sbr.rel (%p143) target = $region61
        $region58: #{_mask_prob_impl.1} parent=53 // loop_body
          %v149 = vld [vmem:[%s147] sm:%s140]
          %150 = vst [vmem:[%s148] sm:%s140] %v149
          %v151 = vld [vmem:[%s147 + $0x4] sm:%s140]
          %152 = vst [vmem:[%s148 + $0x8] sm:%s140] %v151
        $region59: #{_mask_prob_impl.1} parent=53 // loop_footer
          %s146 = sadd.s32 1, %s142
        $region60: #{_mask_prob_impl.1} parent=53 // loop_footer_branch
          %141 = sbr.rel target = $region56
        $region61: #{_mask_prob_impl.1} parent=53 // loop_exit
          _
      $region54: #{_mask_prob_impl.1} parent=38 // pred_fallthru
        _
    $region39: #{_mask_prob_impl.1} parent=4 // pred_fallthru
      _
    // Predicated region
    $region40: #{_mask_prob_impl.1} parent=4 // pred_check
      %p114 = pneg %p110
    $region41: #{_mask_prob_impl.1} parent=4 // pred_check_branch
      %116 = sbr.rel (%p114) target = $region43
    $region42: #{_mask_prob_impl.1} parent=4 // pred_region
      %s117 = sshllo.u32 0, 1
      loop: start=0, step=1, limit=1
      $region44: #{_mask_prob_impl.1} parent=42 // loop_pre_header
        _
      $region45: #{_mask_prob_impl.1} parent=42 // loop_header
        %s119 = sphi 0, %s123
        %p120 = scmp.ge.s32.totalorder %s119, 1
        %s124 = sphi %s104, %s104
        %s125 = sphi %s106, %s106
      $region46: #{_mask_prob_impl.1} parent=42 // loop_header_branch
        %122 = sbr.rel (%p120) target = $region50
      $region47: #{_mask_prob_impl.1} parent=42 // loop_body
        %v126 = vld [vmem:[%s124] sm:%s117]
        %127 = vst [vmem:[%s125] sm:%s117] %v126
        %v128 = vld [vmem:[%s124 + $0x4] sm:%s117]
        %129 = vst [vmem:[%s125 + $0x8] sm:%s117] %v128
      $region48: #{_mask_prob_impl.1} parent=42 // loop_footer
        %s123 = sadd.s32 1, %s119
      $region49: #{_mask_prob_impl.1} parent=42 // loop_footer_branch
        %118 = sbr.rel target = $region45
      $region50: #{_mask_prob_impl.1} parent=42 // loop_exit
        _
    $region43: #{_mask_prob_impl.1} parent=4 // pred_fallthru
      _
    // Predicated region
    $region62: #{_mask_prob_impl.1} parent=4 // pred_check
      _
    $region63: #{_mask_prob_impl.1} parent=4 // pred_check_branch
      %155 = sbr.rel (0) target = $region65
    $region64: #{_mask_prob_impl.1} parent=4 // pred_region
      %156 = vsyncadd %s108, 32
    $region65: #{_mask_prob_impl.1} parent=4 // pred_fallthru
      _
    %s157 = sadd.s32 %s32, 2
    %p158 = scmp.lt.s32.totalorder %s157, 5
    %s159 = scalar_select %p158, %s157, 5
    %s160 = sld [smem:[#allocation5 + %s159]]
    %s161 = sshrl.u32 %s160, 2
    %s162 = sand.u32 %s160, 3
    %s163 = smul.u32 %s161, 8
    %s164 = sadd.s32 %s162, %s163
    %s165 = smul.u32 %s159, 8
    %s166 = sadd.s32 %s164, %s165
    %s167 = scalar_lea.vmem %s1, %s166
    %s168 = sadd.s32 2, %s43
    %s169 = scalar_lea.vmem [#allocation2], %s168
    %s170 = sadd.s32 %s27, 4
    %s171 = scalar_lea.sflag [#allocation3], %s170
    %p173 = scmp.lt.u32.totalorder 1, 8
    %p174 = pneg %p173
    // Predicated region
    $region66: #{_mask_prob_impl.1} parent=4 // pred_check
      _
    $region67: #{_mask_prob_impl.1} parent=4 // pred_check_branch
      %176 = sbr.rel (%p173) target = $region69
    $region68: #{_mask_prob_impl.1} parent=4 // pred_region
      %s193 = sand.u32 1, 7
      %p194 = scmp.eq.s32.totalorder %s193, 0
      %p195 = pneg %p194
      // Predicated region
      $region81: #{_mask_prob_impl.1} parent=68 // pred_check
        _
      $region82: #{_mask_prob_impl.1} parent=68 // pred_check_branch
        %197 = sbr.rel (%p194) target = $region84
      $region83: #{_mask_prob_impl.1} parent=68 // pred_region
        %s198 = sand.u32 1, 7
        %s199 = ssub.s32 1, %s198
        %s200 = scalar_lea.vmem %s167, %s199
        %s201 = ssub.s32 1, %s198
        %s202 = scalar_lea.vmem %s169, %s201 [#allocation2]
        %s203 = sshllo.u32 0, %s198
        loop: start=0, step=1, limit=1
        $region85: #{_mask_prob_impl.1} parent=83 // loop_pre_header
          _
        $region86: #{_mask_prob_impl.1} parent=83 // loop_header
          %s205 = sphi 0, %s209
          %p206 = scmp.ge.s32.totalorder %s205, 1
          %s210 = sphi %s200, %s200
          %s211 = sphi %s202, %s202
        $region87: #{_mask_prob_impl.1} parent=83 // loop_header_branch
          %208 = sbr.rel (%p206) target = $region91
        $region88: #{_mask_prob_impl.1} parent=83 // loop_body
          %v212 = vld [vmem:[%s210] sm:%s203]
          %213 = vst [vmem:[%s211] sm:%s203] %v212
          %v214 = vld [vmem:[%s210 + $0x4] sm:%s203]
          %215 = vst [vmem:[%s211 + $0x8] sm:%s203] %v214
        $region89: #{_mask_prob_impl.1} parent=83 // loop_footer
          %s209 = sadd.s32 1, %s205
        $region90: #{_mask_prob_impl.1} parent=83 // loop_footer_branch
          %204 = sbr.rel target = $region86
        $region91: #{_mask_prob_impl.1} parent=83 // loop_exit
          _
      $region84: #{_mask_prob_impl.1} parent=68 // pred_fallthru
        _
    $region69: #{_mask_prob_impl.1} parent=4 // pred_fallthru
      _
    // Predicated region
    $region70: #{_mask_prob_impl.1} parent=4 // pred_check
      %p177 = pneg %p173
    $region71: #{_mask_prob_impl.1} parent=4 // pred_check_branch
      %179 = sbr.rel (%p177) target = $region73
    $region72: #{_mask_prob_impl.1} parent=4 // pred_region
      %s180 = sshllo.u32 0, 1
      loop: start=0, step=1, limit=1
      $region74: #{_mask_prob_impl.1} parent=72 // loop_pre_header
        _
      $region75: #{_mask_prob_impl.1} parent=72 // loop_header
        %s182 = sphi 0, %s186
        %p183 = scmp.ge.s32.totalorder %s182, 1
        %s187 = sphi %s167, %s167
        %s188 = sphi %s169, %s169
      $region76: #{_mask_prob_impl.1} parent=72 // loop_header_branch
        %185 = sbr.rel (%p183) target = $region80
      $region77: #{_mask_prob_impl.1} parent=72 // loop_body
        %v189 = vld [vmem:[%s187] sm:%s180]
        %190 = vst [vmem:[%s188] sm:%s180] %v189
        %v191 = vld [vmem:[%s187 + $0x4] sm:%s180]
        %192 = vst [vmem:[%s188 + $0x8] sm:%s180] %v191
      $region78: #{_mask_prob_impl.1} parent=72 // loop_footer
        %s186 = sadd.s32 1, %s182
      $region79: #{_mask_prob_impl.1} parent=72 // loop_footer_branch
        %181 = sbr.rel target = $region75
      $region80: #{_mask_prob_impl.1} parent=72 // loop_exit
        _
    $region73: #{_mask_prob_impl.1} parent=4 // pred_fallthru
      _
    // Predicated region
    $region92: #{_mask_prob_impl.1} parent=4 // pred_check
      _
    $region93: #{_mask_prob_impl.1} parent=4 // pred_check_branch
      %218 = sbr.rel (0) target = $region95
    $region94: #{_mask_prob_impl.1} parent=4 // pred_region
      %219 = vsyncadd %s171, 32
    $region95: #{_mask_prob_impl.1} parent=4 // pred_fallthru
      _
    %s220 = sadd.s32 %s32, 3
    %p221 = scmp.lt.s32.totalorder %s220, 5
    %s222 = scalar_select %p221, %s220, 5
    %s223 = sld [smem:[#allocation5 + %s222]]
    %s224 = sshrl.u32 %s223, 2
    %s225 = sand.u32 %s223, 3
    %s226 = smul.u32 %s224, 8
    %s227 = sadd.s32 %s225, %s226
    %s228 = smul.u32 %s222, 8
    %s229 = sadd.s32 %s227, %s228
    %s230 = scalar_lea.vmem %s1, %s229
    %s231 = sadd.s32 3, %s43
    %s232 = scalar_lea.vmem [#allocation2], %s231
    %s233 = sadd.s32 %s27, 6
    %s234 = scalar_lea.sflag [#allocation3], %s233
    %p236 = scmp.lt.u32.totalorder 1, 8
    %p237 = pneg %p236
    // Predicated region
    $region96: #{_mask_prob_impl.1} parent=4 // pred_check
      _
    $region97: #{_mask_prob_impl.1} parent=4 // pred_check_branch
      %239 = sbr.rel (%p236) target = $region99
    $region98: #{_mask_prob_impl.1} parent=4 // pred_region
      %s256 = sand.u32 1, 7
      %p257 = scmp.eq.s32.totalorder %s256, 0
      %p258 = pneg %p257
      // Predicated region
      $region111: #{_mask_prob_impl.1} parent=98 // pred_check
        _
      $region112: #{_mask_prob_impl.1} parent=98 // pred_check_branch
        %260 = sbr.rel (%p257) target = $region114
      $region113: #{_mask_prob_impl.1} parent=98 // pred_region
        %s261 = sand.u32 1, 7
        %s262 = ssub.s32 1, %s261
        %s263 = scalar_lea.vmem %s230, %s262
        %s264 = ssub.s32 1, %s261
        %s265 = scalar_lea.vmem %s232, %s264 [#allocation2]
        %s266 = sshllo.u32 0, %s261
        loop: start=0, step=1, limit=1
        $region115: #{_mask_prob_impl.1} parent=113 // loop_pre_header
          _
        $region116: #{_mask_prob_impl.1} parent=113 // loop_header
          %s268 = sphi 0, %s272
          %p269 = scmp.ge.s32.totalorder %s268, 1
          %s273 = sphi %s263, %s263
          %s274 = sphi %s265, %s265
        $region117: #{_mask_prob_impl.1} parent=113 // loop_header_branch
          %271 = sbr.rel (%p269) target = $region121
        $region118: #{_mask_prob_impl.1} parent=113 // loop_body
          %v275 = vld [vmem:[%s273] sm:%s266]
          %276 = vst [vmem:[%s274] sm:%s266] %v275
          %v277 = vld [vmem:[%s273 + $0x4] sm:%s266]
          %278 = vst [vmem:[%s274 + $0x8] sm:%s266] %v277
        $region119: #{_mask_prob_impl.1} parent=113 // loop_footer
          %s272 = sadd.s32 1, %s268
        $region120: #{_mask_prob_impl.1} parent=113 // loop_footer_branch
          %267 = sbr.rel target = $region116
        $region121: #{_mask_prob_impl.1} parent=113 // loop_exit
          _
      $region114: #{_mask_prob_impl.1} parent=98 // pred_fallthru
        _
    $region99: #{_mask_prob_impl.1} parent=4 // pred_fallthru
      _
    // Predicated region
    $region100: #{_mask_prob_impl.1} parent=4 // pred_check
      %p240 = pneg %p236
    $region101: #{_mask_prob_impl.1} parent=4 // pred_check_branch
      %242 = sbr.rel (%p240) target = $region103
    $region102: #{_mask_prob_impl.1} parent=4 // pred_region
      %s243 = sshllo.u32 0, 1
      loop: start=0, step=1, limit=1
      $region104: #{_mask_prob_impl.1} parent=102 // loop_pre_header
        _
      $region105: #{_mask_prob_impl.1} parent=102 // loop_header
        %s245 = sphi 0, %s249
        %p246 = scmp.ge.s32.totalorder %s245, 1
        %s250 = sphi %s230, %s230
        %s251 = sphi %s232, %s232
      $region106: #{_mask_prob_impl.1} parent=102 // loop_header_branch
        %248 = sbr.rel (%p246) target = $region110
      $region107: #{_mask_prob_impl.1} parent=102 // loop_body
        %v252 = vld [vmem:[%s250] sm:%s243]
        %253 = vst [vmem:[%s251] sm:%s243] %v252
        %v254 = vld [vmem:[%s250 + $0x4] sm:%s243]
        %255 = vst [vmem:[%s251 + $0x8] sm:%s243] %v254
      $region108: #{_mask_prob_impl.1} parent=102 // loop_footer
        %s249 = sadd.s32 1, %s245
      $region109: #{_mask_prob_impl.1} parent=102 // loop_footer_branch
        %244 = sbr.rel target = $region105
      $region110: #{_mask_prob_impl.1} parent=102 // loop_exit
        _
    $region103: #{_mask_prob_impl.1} parent=4 // pred_fallthru
      _
    // Predicated region
    $region122: #{_mask_prob_impl.1} parent=4 // pred_check
      _
    $region123: #{_mask_prob_impl.1} parent=4 // pred_check_branch
      %281 = sbr.rel (0) target = $region125
    $region124: #{_mask_prob_impl.1} parent=4 // pred_region
      %282 = vsyncadd %s234, 32
    $region125: #{_mask_prob_impl.1} parent=4 // pred_fallthru
      _
    %s283 = sadd.s32 %s32, 4
    %p284 = scmp.lt.s32.totalorder %s283, 5
    %s285 = scalar_select %p284, %s283, 5
    %s286 = sld [smem:[#allocation5 + %s285]]
    %s287 = sshrl.u32 %s286, 2
    %s288 = sand.u32 %s286, 3
    %s289 = smul.u32 %s287, 8
    %s290 = sadd.s32 %s288, %s289
    %s291 = smul.u32 %s285, 8
    %s292 = sadd.s32 %s290, %s291
    %s293 = scalar_lea.vmem %s1, %s292
    %s294 = sadd.s32 4, %s43
    %s295 = scalar_lea.vmem [#allocation2], %s294
    %s296 = sadd.s32 %s27, 8
    %s297 = scalar_lea.sflag [#allocation3], %s296
    %p299 = scmp.lt.u32.totalorder 1, 8
    %p300 = pneg %p299
    // Predicated region
    $region126: #{_mask_prob_impl.1} parent=4 // pred_check
      _
    $region127: #{_mask_prob_impl.1} parent=4 // pred_check_branch
      %302 = sbr.rel (%p299) target = $region129
    $region128: #{_mask_prob_impl.1} parent=4 // pred_region
      %s319 = sand.u32 1, 7
      %p320 = scmp.eq.s32.totalorder %s319, 0
      %p321 = pneg %p320
      // Predicated region
      $region141: #{_mask_prob_impl.1} parent=128 // pred_check
        _
      $region142: #{_mask_prob_impl.1} parent=128 // pred_check_branch
        %323 = sbr.rel (%p320) target = $region144
      $region143: #{_mask_prob_impl.1} parent=128 // pred_region
        %s324 = sand.u32 1, 7
        %s325 = ssub.s32 1, %s324
        %s326 = scalar_lea.vmem %s293, %s325
        %s327 = ssub.s32 1, %s324
        %s328 = scalar_lea.vmem %s295, %s327 [#allocation2]
        %s329 = sshllo.u32 0, %s324
        loop: start=0, step=1, limit=1
        $region145: #{_mask_prob_impl.1} parent=143 // loop_pre_header
          _
        $region146: #{_mask_prob_impl.1} parent=143 // loop_header
          %s331 = sphi 0, %s335
          %p332 = scmp.ge.s32.totalorder %s331, 1
          %s336 = sphi %s326, %s326
          %s337 = sphi %s328, %s328
        $region147: #{_mask_prob_impl.1} parent=143 // loop_header_branch
          %334 = sbr.rel (%p332) target = $region151
        $region148: #{_mask_prob_impl.1} parent=143 // loop_body
          %v338 = vld [vmem:[%s336] sm:%s329]
          %339 = vst [vmem:[%s337] sm:%s329] %v338
          %v340 = vld [vmem:[%s336 + $0x4] sm:%s329]
          %341 = vst [vmem:[%s337 + $0x8] sm:%s329] %v340
        $region149: #{_mask_prob_impl.1} parent=143 // loop_footer
          %s335 = sadd.s32 1, %s331
        $region150: #{_mask_prob_impl.1} parent=143 // loop_footer_branch
          %330 = sbr.rel target = $region146
        $region151: #{_mask_prob_impl.1} parent=143 // loop_exit
          _
      $region144: #{_mask_prob_impl.1} parent=128 // pred_fallthru
        _
    $region129: #{_mask_prob_impl.1} parent=4 // pred_fallthru
      _
    // Predicated region
    $region130: #{_mask_prob_impl.1} parent=4 // pred_check
      %p303 = pneg %p299
    $region131: #{_mask_prob_impl.1} parent=4 // pred_check_branch
      %305 = sbr.rel (%p303) target = $region133
    $region132: #{_mask_prob_impl.1} parent=4 // pred_region
      %s306 = sshllo.u32 0, 1
      loop: start=0, step=1, limit=1
      $region134: #{_mask_prob_impl.1} parent=132 // loop_pre_header
        _
      $region135: #{_mask_prob_impl.1} parent=132 // loop_header
        %s308 = sphi 0, %s312
        %p309 = scmp.ge.s32.totalorder %s308, 1
        %s313 = sphi %s293, %s293
        %s314 = sphi %s295, %s295
      $region136: #{_mask_prob_impl.1} parent=132 // loop_header_branch
        %311 = sbr.rel (%p309) target = $region140
      $region137: #{_mask_prob_impl.1} parent=132 // loop_body
        %v315 = vld [vmem:[%s313] sm:%s306]
        %316 = vst [vmem:[%s314] sm:%s306] %v315
        %v317 = vld [vmem:[%s313 + $0x4] sm:%s306]
        %318 = vst [vmem:[%s314 + $0x8] sm:%s306] %v317
      $region138: #{_mask_prob_impl.1} parent=132 // loop_footer
        %s312 = sadd.s32 1, %s308
      $region139: #{_mask_prob_impl.1} parent=132 // loop_footer_branch
        %307 = sbr.rel target = $region135
      $region140: #{_mask_prob_impl.1} parent=132 // loop_exit
        _
    $region133: #{_mask_prob_impl.1} parent=4 // pred_fallthru
      _
    // Predicated region
    $region152: #{_mask_prob_impl.1} parent=4 // pred_check
      _
    $region153: #{_mask_prob_impl.1} parent=4 // pred_check_branch
      %344 = sbr.rel (0) target = $region155
    $region154: #{_mask_prob_impl.1} parent=4 // pred_region
      %345 = vsyncadd %s297, 32
    $region155: #{_mask_prob_impl.1} parent=4 // pred_fallthru
      _
    %s346 = sadd.s32 %s32, 5
    %p347 = scmp.lt.s32.totalorder %s346, 5
    %s348 = scalar_select %p347, %s346, 5
    %s349 = sld [smem:[#allocation5 + %s348]]
    %s350 = sshrl.u32 %s349, 2
    %s351 = sand.u32 %s349, 3
    %s352 = smul.u32 %s350, 8
    %s353 = sadd.s32 %s351, %s352
    %s354 = smul.u32 %s348, 8
    %s355 = sadd.s32 %s353, %s354
    %s356 = scalar_lea.vmem %s1, %s355
    %s357 = sadd.s32 5, %s43
    %s358 = scalar_lea.vmem [#allocation2], %s357
    %s359 = sadd.s32 %s27, 10
    %s360 = scalar_lea.sflag [#allocation3], %s359
    %p362 = scmp.lt.u32.totalorder 1, 8
    %p363 = pneg %p362
    // Predicated region
    $region156: #{_mask_prob_impl.1} parent=4 // pred_check
      _
    $region157: #{_mask_prob_impl.1} parent=4 // pred_check_branch
      %365 = sbr.rel (%p362) target = $region159
    $region158: #{_mask_prob_impl.1} parent=4 // pred_region
      %s382 = sand.u32 1, 7
      %p383 = scmp.eq.s32.totalorder %s382, 0
      %p384 = pneg %p383
      // Predicated region
      $region171: #{_mask_prob_impl.1} parent=158 // pred_check
        _
      $region172: #{_mask_prob_impl.1} parent=158 // pred_check_branch
        %386 = sbr.rel (%p383) target = $region174
      $region173: #{_mask_prob_impl.1} parent=158 // pred_region
        %s387 = sand.u32 1, 7
        %s388 = ssub.s32 1, %s387
        %s389 = scalar_lea.vmem %s356, %s388
        %s390 = ssub.s32 1, %s387
        %s391 = scalar_lea.vmem %s358, %s390 [#allocation2]
        %s392 = sshllo.u32 0, %s387
        loop: start=0, step=1, limit=1
        $region175: #{_mask_prob_impl.1} parent=173 // loop_pre_header
          _
        $region176: #{_mask_prob_impl.1} parent=173 // loop_header
          %s394 = sphi 0, %s398
          %p395 = scmp.ge.s32.totalorder %s394, 1
          %s399 = sphi %s389, %s389
          %s400 = sphi %s391, %s391
        $region177: #{_mask_prob_impl.1} parent=173 // loop_header_branch
          %397 = sbr.rel (%p395) target = $region181
        $region178: #{_mask_prob_impl.1} parent=173 // loop_body
          %v401 = vld [vmem:[%s399] sm:%s392]
          %402 = vst [vmem:[%s400] sm:%s392] %v401
          %v403 = vld [vmem:[%s399 + $0x4] sm:%s392]
          %404 = vst [vmem:[%s400 + $0x8] sm:%s392] %v403
        $region179: #{_mask_prob_impl.1} parent=173 // loop_footer
          %s398 = sadd.s32 1, %s394
        $region180: #{_mask_prob_impl.1} parent=173 // loop_footer_branch
          %393 = sbr.rel target = $region176
        $region181: #{_mask_prob_impl.1} parent=173 // loop_exit
          _
      $region174: #{_mask_prob_impl.1} parent=158 // pred_fallthru
        _
    $region159: #{_mask_prob_impl.1} parent=4 // pred_fallthru
      _
    // Predicated region
    $region160: #{_mask_prob_impl.1} parent=4 // pred_check
      %p366 = pneg %p362
    $region161: #{_mask_prob_impl.1} parent=4 // pred_check_branch
      %368 = sbr.rel (%p366) target = $region163
    $region162: #{_mask_prob_impl.1} parent=4 // pred_region
      %s369 = sshllo.u32 0, 1
      loop: start=0, step=1, limit=1
      $region164: #{_mask_prob_impl.1} parent=162 // loop_pre_header
        _
      $region165: #{_mask_prob_impl.1} parent=162 // loop_header
        %s371 = sphi 0, %s375
        %p372 = scmp.ge.s32.totalorder %s371, 1
        %s376 = sphi %s356, %s356
        %s377 = sphi %s358, %s358
      $region166: #{_mask_prob_impl.1} parent=162 // loop_header_branch
        %374 = sbr.rel (%p372) target = $region170
      $region167: #{_mask_prob_impl.1} parent=162 // loop_body
        %v378 = vld [vmem:[%s376] sm:%s369]
        %379 = vst [vmem:[%s377] sm:%s369] %v378
        %v380 = vld [vmem:[%s376 + $0x4] sm:%s369]
        %381 = vst [vmem:[%s377 + $0x8] sm:%s369] %v380
      $region168: #{_mask_prob_impl.1} parent=162 // loop_footer
        %s375 = sadd.s32 1, %s371
      $region169: #{_mask_prob_impl.1} parent=162 // loop_footer_branch
        %370 = sbr.rel target = $region165
      $region170: #{_mask_prob_impl.1} parent=162 // loop_exit
        _
    $region163: #{_mask_prob_impl.1} parent=4 // pred_fallthru
      _
    // Predicated region
    $region182: #{_mask_prob_impl.1} parent=4 // pred_check
      _
    $region183: #{_mask_prob_impl.1} parent=4 // pred_check_branch
      %407 = sbr.rel (0) target = $region185
    $region184: #{_mask_prob_impl.1} parent=4 // pred_region
      %408 = vsyncadd %s360, 32
    $region185: #{_mask_prob_impl.1} parent=4 // pred_fallthru
      _
    %s409 = sadd.s32 %s32, 6
    %p410 = scmp.lt.s32.totalorder %s409, 5
    %s411 = scalar_select %p410, %s409, 5
    %s412 = sld [smem:[#allocation5 + %s411]]
    %s413 = sshrl.u32 %s412, 2
    %s414 = sand.u32 %s412, 3
    %s415 = smul.u32 %s413, 8
    %s416 = sadd.s32 %s414, %s415
    %s417 = smul.u32 %s411, 8
    %s418 = sadd.s32 %s416, %s417
    %s419 = scalar_lea.vmem %s1, %s418
    %s420 = sadd.s32 6, %s43
    %s421 = scalar_lea.vmem [#allocation2], %s420
    %s422 = sadd.s32 %s27, 12
    %s423 = scalar_lea.sflag [#allocation3], %s422
    %p425 = scmp.lt.u32.totalorder 1, 8
    %p426 = pneg %p425
    // Predicated region
    $region186: #{_mask_prob_impl.1} parent=4 // pred_check
      _
    $region187: #{_mask_prob_impl.1} parent=4 // pred_check_branch
      %428 = sbr.rel (%p425) target = $region189
    $region188: #{_mask_prob_impl.1} parent=4 // pred_region
      %s445 = sand.u32 1, 7
      %p446 = scmp.eq.s32.totalorder %s445, 0
      %p447 = pneg %p446
      // Predicated region
      $region201: #{_mask_prob_impl.1} parent=188 // pred_check
        _
      $region202: #{_mask_prob_impl.1} parent=188 // pred_check_branch
        %449 = sbr.rel (%p446) target = $region204
      $region203: #{_mask_prob_impl.1} parent=188 // pred_region
        %s450 = sand.u32 1, 7
        %s451 = ssub.s32 1, %s450
        %s452 = scalar_lea.vmem %s419, %s451
        %s453 = ssub.s32 1, %s450
        %s454 = scalar_lea.vmem %s421, %s453 [#allocation2]
        %s455 = sshllo.u32 0, %s450
        loop: start=0, step=1, limit=1
        $region205: #{_mask_prob_impl.1} parent=203 // loop_pre_header
          _
        $region206: #{_mask_prob_impl.1} parent=203 // loop_header
          %s457 = sphi 0, %s461
          %p458 = scmp.ge.s32.totalorder %s457, 1
          %s462 = sphi %s452, %s452
          %s463 = sphi %s454, %s454
        $region207: #{_mask_prob_impl.1} parent=203 // loop_header_branch
          %460 = sbr.rel (%p458) target = $region211
        $region208: #{_mask_prob_impl.1} parent=203 // loop_body
          %v464 = vld [vmem:[%s462] sm:%s455]
          %465 = vst [vmem:[%s463] sm:%s455] %v464
          %v466 = vld [vmem:[%s462 + $0x4] sm:%s455]
          %467 = vst [vmem:[%s463 + $0x8] sm:%s455] %v466
        $region209: #{_mask_prob_impl.1} parent=203 // loop_footer
          %s461 = sadd.s32 1, %s457
        $region210: #{_mask_prob_impl.1} parent=203 // loop_footer_branch
          %456 = sbr.rel target = $region206
        $region211: #{_mask_prob_impl.1} parent=203 // loop_exit
          _
      $region204: #{_mask_prob_impl.1} parent=188 // pred_fallthru
        _
    $region189: #{_mask_prob_impl.1} parent=4 // pred_fallthru
      _
    // Predicated region
    $region190: #{_mask_prob_impl.1} parent=4 // pred_check
      %p429 = pneg %p425
    $region191: #{_mask_prob_impl.1} parent=4 // pred_check_branch
      %431 = sbr.rel (%p429) target = $region193
    $region192: #{_mask_prob_impl.1} parent=4 // pred_region
      %s432 = sshllo.u32 0, 1
      loop: start=0, step=1, limit=1
      $region194: #{_mask_prob_impl.1} parent=192 // loop_pre_header
        _
      $region195: #{_mask_prob_impl.1} parent=192 // loop_header
        %s434 = sphi 0, %s438
        %p435 = scmp.ge.s32.totalorder %s434, 1
        %s439 = sphi %s419, %s419
        %s440 = sphi %s421, %s421
      $region196: #{_mask_prob_impl.1} parent=192 // loop_header_branch
        %437 = sbr.rel (%p435) target = $region200
      $region197: #{_mask_prob_impl.1} parent=192 // loop_body
        %v441 = vld [vmem:[%s439] sm:%s432]
        %442 = vst [vmem:[%s440] sm:%s432] %v441
        %v443 = vld [vmem:[%s439 + $0x4] sm:%s432]
        %444 = vst [vmem:[%s440 + $0x8] sm:%s432] %v443
      $region198: #{_mask_prob_impl.1} parent=192 // loop_footer
        %s438 = sadd.s32 1, %s434
      $region199: #{_mask_prob_impl.1} parent=192 // loop_footer_branch
        %433 = sbr.rel target = $region195
      $region200: #{_mask_prob_impl.1} parent=192 // loop_exit
        _
    $region193: #{_mask_prob_impl.1} parent=4 // pred_fallthru
      _
    // Predicated region
    $region212: #{_mask_prob_impl.1} parent=4 // pred_check
      _
    $region213: #{_mask_prob_impl.1} parent=4 // pred_check_branch
      %470 = sbr.rel (0) target = $region215
    $region214: #{_mask_prob_impl.1} parent=4 // pred_region
      %471 = vsyncadd %s423, 32
    $region215: #{_mask_prob_impl.1} parent=4 // pred_fallthru
      _
    %s472 = sadd.s32 %s32, 7
    %p473 = scmp.lt.s32.totalorder %s472, 5
    %s474 = scalar_select %p473, %s472, 5
    %s475 = sld [smem:[#allocation5 + %s474]]
    %s476 = sshrl.u32 %s475, 2
    %s477 = sand.u32 %s475, 3
    %s478 = smul.u32 %s476, 8
    %s479 = sadd.s32 %s477, %s478
    %s480 = smul.u32 %s474, 8
    %s481 = sadd.s32 %s479, %s480
    %s482 = scalar_lea.vmem %s1, %s481
    %s483 = sadd.s32 7, %s43
    %s484 = scalar_lea.vmem [#allocation2], %s483
    %s485 = sadd.s32 %s27, 14
    %s486 = scalar_lea.sflag [#allocation3], %s485
    %p488 = scmp.lt.u32.totalorder 1, 8
    %p489 = pneg %p488
    // Predicated region
    $region216: #{_mask_prob_impl.1} parent=4 // pred_check
      _
    $region217: #{_mask_prob_impl.1} parent=4 // pred_check_branch
      %491 = sbr.rel (%p488) target = $region219
    $region218: #{_mask_prob_impl.1} parent=4 // pred_region
      %s508 = sand.u32 1, 7
      %p509 = scmp.eq.s32.totalorder %s508, 0
      %p510 = pneg %p509
      // Predicated region
      $region231: #{_mask_prob_impl.1} parent=218 // pred_check
        _
      $region232: #{_mask_prob_impl.1} parent=218 // pred_check_branch
        %512 = sbr.rel (%p509) target = $region234
      $region233: #{_mask_prob_impl.1} parent=218 // pred_region
        %s513 = sand.u32 1, 7
        %s514 = ssub.s32 1, %s513
        %s515 = scalar_lea.vmem %s482, %s514
        %s516 = ssub.s32 1, %s513
        %s517 = scalar_lea.vmem %s484, %s516 [#allocation2]
        %s518 = sshllo.u32 0, %s513
        loop: start=0, step=1, limit=1
        $region235: #{_mask_prob_impl.1} parent=233 // loop_pre_header
          _
        $region236: #{_mask_prob_impl.1} parent=233 // loop_header
          %s520 = sphi 0, %s524
          %p521 = scmp.ge.s32.totalorder %s520, 1
          %s525 = sphi %s515, %s515
          %s526 = sphi %s517, %s517
        $region237: #{_mask_prob_impl.1} parent=233 // loop_header_branch
          %523 = sbr.rel (%p521) target = $region241
        $region238: #{_mask_prob_impl.1} parent=233 // loop_body
          %v527 = vld [vmem:[%s525] sm:%s518]
          %528 = vst [vmem:[%s526] sm:%s518] %v527
          %v529 = vld [vmem:[%s525 + $0x4] sm:%s518]
          %530 = vst [vmem:[%s526 + $0x8] sm:%s518] %v529
        $region239: #{_mask_prob_impl.1} parent=233 // loop_footer
          %s524 = sadd.s32 1, %s520
        $region240: #{_mask_prob_impl.1} parent=233 // loop_footer_branch
          %519 = sbr.rel target = $region236
        $region241: #{_mask_prob_impl.1} parent=233 // loop_exit
          _
      $region234: #{_mask_prob_impl.1} parent=218 // pred_fallthru
        _
    $region219: #{_mask_prob_impl.1} parent=4 // pred_fallthru
      _
    // Predicated region
    $region220: #{_mask_prob_impl.1} parent=4 // pred_check
      %p492 = pneg %p488
    $region221: #{_mask_prob_impl.1} parent=4 // pred_check_branch
      %494 = sbr.rel (%p492) target = $region223
    $region222: #{_mask_prob_impl.1} parent=4 // pred_region
      %s495 = sshllo.u32 0, 1
      loop: start=0, step=1, limit=1
      $region224: #{_mask_prob_impl.1} parent=222 // loop_pre_header
        _
      $region225: #{_mask_prob_impl.1} parent=222 // loop_header
        %s497 = sphi 0, %s501
        %p498 = scmp.ge.s32.totalorder %s497, 1
        %s502 = sphi %s482, %s482
        %s503 = sphi %s484, %s484
      $region226: #{_mask_prob_impl.1} parent=222 // loop_header_branch
        %500 = sbr.rel (%p498) target = $region230
      $region227: #{_mask_prob_impl.1} parent=222 // loop_body
        %v504 = vld [vmem:[%s502] sm:%s495]
        %505 = vst [vmem:[%s503] sm:%s495] %v504
        %v506 = vld [vmem:[%s502 + $0x4] sm:%s495]
        %507 = vst [vmem:[%s503 + $0x8] sm:%s495] %v506
      $region228: #{_mask_prob_impl.1} parent=222 // loop_footer
        %s501 = sadd.s32 1, %s497
      $region229: #{_mask_prob_impl.1} parent=222 // loop_footer_branch
        %496 = sbr.rel target = $region225
      $region230: #{_mask_prob_impl.1} parent=222 // loop_exit
        _
    $region223: #{_mask_prob_impl.1} parent=4 // pred_fallthru
      _
    // Predicated region
    $region242: #{_mask_prob_impl.1} parent=4 // pred_check
      _
    $region243: #{_mask_prob_impl.1} parent=4 // pred_check_branch
      %533 = sbr.rel (0) target = $region245
    $region244: #{_mask_prob_impl.1} parent=4 // pred_region
      %534 = vsyncadd %s486, 32
    $region245: #{_mask_prob_impl.1} parent=4 // pred_fallthru
      _
  $region5: #{_mask_prob_impl.1} parent=0 // pred_fallthru
    _
  %s535 = sadd.s32 0, 1
  %p536 = scmp.lt.s32.totalorder %s535, 1
  // Predicated region
  $region246: #{_mask_prob_impl.1} parent=0 // pred_check
    %p537 = pneg %p536
  $region247: #{_mask_prob_impl.1} parent=0 // pred_check_branch
    %539 = sbr.rel (%p537) target = $region249
  $region248: #{_mask_prob_impl.1} parent=0 // pred_region
    %s540 = sadd.s32 %s26, 1
    %s541 = sand.u32 %s535, 1
    %s542 = smul.u32 %s540, 8
    %p543 = scmp.lt.s32.totalorder %s542, 5
    %s544 = scalar_select %p543, %s542, 5
    %s545 = sld [smem:[#allocation5 + %s544]]
    %s546 = sshrl.u32 %s545, 2
    %s547 = sand.u32 %s545, 3
    %s548 = smul.u32 %s546, 8
    %s549 = sadd.s32 %s547, %s548
    %s550 = smul.u32 %s544, 8
    %s551 = sadd.s32 %s549, %s550
    %s552 = scalar_lea.vmem %s1, %s551
    %s553 = smul.u32 %s541, 16
    %s554 = scalar_lea.vmem [#allocation2], %s553
    %s555 = scalar_lea.sflag [#allocation3], %s541
    %p557 = scmp.lt.u32.totalorder 1, 8
    %p558 = pneg %p557
    // Predicated region
    $region250: #{_mask_prob_impl.1} parent=248 // pred_check
      _
    $region251: #{_mask_prob_impl.1} parent=248 // pred_check_branch
      %560 = sbr.rel (%p557) target = $region253
    $region252: #{_mask_prob_impl.1} parent=248 // pred_region
      %s577 = sand.u32 1, 7
      %p578 = scmp.eq.s32.totalorder %s577, 0
      %p579 = pneg %p578
      // Predicated region
      $region265: #{_mask_prob_impl.1} parent=252 // pred_check
        _
      $region266: #{_mask_prob_impl.1} parent=252 // pred_check_branch
        %581 = sbr.rel (%p578) target = $region268
      $region267: #{_mask_prob_impl.1} parent=252 // pred_region
        %s582 = sand.u32 1, 7
        %s583 = ssub.s32 1, %s582
        %s584 = scalar_lea.vmem %s552, %s583
        %s585 = ssub.s32 1, %s582
        %s586 = scalar_lea.vmem %s554, %s585 [#allocation2]
        %s587 = sshllo.u32 0, %s582
        loop: start=0, step=1, limit=1
        $region269: #{_mask_prob_impl.1} parent=267 // loop_pre_header
          _
        $region270: #{_mask_prob_impl.1} parent=267 // loop_header
          %s589 = sphi 0, %s593
          %p590 = scmp.ge.s32.totalorder %s589, 1
          %s594 = sphi %s584, %s584
          %s595 = sphi %s586, %s586
        $region271: #{_mask_prob_impl.1} parent=267 // loop_header_branch
          %592 = sbr.rel (%p590) target = $region275
        $region272: #{_mask_prob_impl.1} parent=267 // loop_body
          %v596 = vld [vmem:[%s594] sm:%s587]
          %597 = vst [vmem:[%s595] sm:%s587] %v596
          %v598 = vld [vmem:[%s594 + $0x4] sm:%s587]
          %599 = vst [vmem:[%s595 + $0x8] sm:%s587] %v598
        $region273: #{_mask_prob_impl.1} parent=267 // loop_footer
          %s593 = sadd.s32 1, %s589
        $region274: #{_mask_prob_impl.1} parent=267 // loop_footer_branch
          %588 = sbr.rel target = $region270
        $region275: #{_mask_prob_impl.1} parent=267 // loop_exit
          _
      $region268: #{_mask_prob_impl.1} parent=252 // pred_fallthru
        _
    $region253: #{_mask_prob_impl.1} parent=248 // pred_fallthru
      _
    // Predicated region
    $region254: #{_mask_prob_impl.1} parent=248 // pred_check
      %p561 = pneg %p557
    $region255: #{_mask_prob_impl.1} parent=248 // pred_check_branch
      %563 = sbr.rel (%p561) target = $region257
    $region256: #{_mask_prob_impl.1} parent=248 // pred_region
      %s564 = sshllo.u32 0, 1
      loop: start=0, step=1, limit=1
      $region258: #{_mask_prob_impl.1} parent=256 // loop_pre_header
        _
      $region259: #{_mask_prob_impl.1} parent=256 // loop_header
        %s566 = sphi 0, %s570
        %p567 = scmp.ge.s32.totalorder %s566, 1
        %s571 = sphi %s552, %s552
        %s572 = sphi %s554, %s554
      $region260: #{_mask_prob_impl.1} parent=256 // loop_header_branch
        %569 = sbr.rel (%p567) target = $region264
      $region261: #{_mask_prob_impl.1} parent=256 // loop_body
        %v573 = vld [vmem:[%s571] sm:%s564]
        %574 = vst [vmem:[%s572] sm:%s564] %v573
        %v575 = vld [vmem:[%s571 + $0x4] sm:%s564]
        %576 = vst [vmem:[%s572 + $0x8] sm:%s564] %v575
      $region262: #{_mask_prob_impl.1} parent=256 // loop_footer
        %s570 = sadd.s32 1, %s566
      $region263: #{_mask_prob_impl.1} parent=256 // loop_footer_branch
        %565 = sbr.rel target = $region259
      $region264: #{_mask_prob_impl.1} parent=256 // loop_exit
        _
    $region257: #{_mask_prob_impl.1} parent=248 // pred_fallthru
      _
    // Predicated region
    $region276: #{_mask_prob_impl.1} parent=248 // pred_check
      _
    $region277: #{_mask_prob_impl.1} parent=248 // pred_check_branch
      %602 = sbr.rel (0) target = $region279
    $region278: #{_mask_prob_impl.1} parent=248 // pred_region
      %603 = vsyncadd %s555, 32
    $region279: #{_mask_prob_impl.1} parent=248 // pred_fallthru
      _
    %s604 = sadd.s32 %s542, 1
    %p605 = scmp.lt.s32.totalorder %s604, 5
    %s606 = scalar_select %p605, %s604, 5
    %s607 = sld [smem:[#allocation5 + %s606]]
    %s608 = sshrl.u32 %s607, 2
    %s609 = sand.u32 %s607, 3
    %s610 = smul.u32 %s608, 8
    %s611 = sadd.s32 %s609, %s610
    %s612 = smul.u32 %s606, 8
    %s613 = sadd.s32 %s611, %s612
    %s614 = scalar_lea.vmem %s1, %s613
    %s615 = sadd.s32 1, %s553
    %s616 = scalar_lea.vmem [#allocation2], %s615
    %s617 = sadd.s32 %s541, 2
    %s618 = scalar_lea.sflag [#allocation3], %s617
    %p620 = scmp.lt.u32.totalorder 1, 8
    %p621 = pneg %p620
    // Predicated region
    $region280: #{_mask_prob_impl.1} parent=248 // pred_check
      _
    $region281: #{_mask_prob_impl.1} parent=248 // pred_check_branch
      %623 = sbr.rel (%p620) target = $region283
    $region282: #{_mask_prob_impl.1} parent=248 // pred_region
      %s640 = sand.u32 1, 7
      %p641 = scmp.eq.s32.totalorder %s640, 0
      %p642 = pneg %p641
      // Predicated region
      $region295: #{_mask_prob_impl.1} parent=282 // pred_check
        _
      $region296: #{_mask_prob_impl.1} parent=282 // pred_check_branch
        %644 = sbr.rel (%p641) target = $region298
      $region297: #{_mask_prob_impl.1} parent=282 // pred_region
        %s645 = sand.u32 1, 7
        %s646 = ssub.s32 1, %s645
        %s647 = scalar_lea.vmem %s614, %s646
        %s648 = ssub.s32 1, %s645
        %s649 = scalar_lea.vmem %s616, %s648 [#allocation2]
        %s650 = sshllo.u32 0, %s645
        loop: start=0, step=1, limit=1
        $region299: #{_mask_prob_impl.1} parent=297 // loop_pre_header
          _
        $region300: #{_mask_prob_impl.1} parent=297 // loop_header
          %s652 = sphi 0, %s656
          %p653 = scmp.ge.s32.totalorder %s652, 1
          %s657 = sphi %s647, %s647
          %s658 = sphi %s649, %s649
        $region301: #{_mask_prob_impl.1} parent=297 // loop_header_branch
          %655 = sbr.rel (%p653) target = $region305
        $region302: #{_mask_prob_impl.1} parent=297 // loop_body
          %v659 = vld [vmem:[%s657] sm:%s650]
          %660 = vst [vmem:[%s658] sm:%s650] %v659
          %v661 = vld [vmem:[%s657 + $0x4] sm:%s650]
          %662 = vst [vmem:[%s658 + $0x8] sm:%s650] %v661
        $region303: #{_mask_prob_impl.1} parent=297 // loop_footer
          %s656 = sadd.s32 1, %s652
        $region304: #{_mask_prob_impl.1} parent=297 // loop_footer_branch
          %651 = sbr.rel target = $region300
        $region305: #{_mask_prob_impl.1} parent=297 // loop_exit
          _
      $region298: #{_mask_prob_impl.1} parent=282 // pred_fallthru
        _
    $region283: #{_mask_prob_impl.1} parent=248 // pred_fallthru
      _
    // Predicated region
    $region284: #{_mask_prob_impl.1} parent=248 // pred_check
      %p624 = pneg %p620
    $region285: #{_mask_prob_impl.1} parent=248 // pred_check_branch
      %626 = sbr.rel (%p624) target = $region287
    $region286: #{_mask_prob_impl.1} parent=248 // pred_region
      %s627 = sshllo.u32 0, 1
      loop: start=0, step=1, limit=1
      $region288: #{_mask_prob_impl.1} parent=286 // loop_pre_header
        _
      $region289: #{_mask_prob_impl.1} parent=286 // loop_header
        %s629 = sphi 0, %s633
        %p630 = scmp.ge.s32.totalorder %s629, 1
        %s634 = sphi %s614, %s614
        %s635 = sphi %s616, %s616
      $region290: #{_mask_prob_impl.1} parent=286 // loop_header_branch
        %632 = sbr.rel (%p630) target = $region294
      $region291: #{_mask_prob_impl.1} parent=286 // loop_body
        %v636 = vld [vmem:[%s634] sm:%s627]
        %637 = vst [vmem:[%s635] sm:%s627] %v636
        %v638 = vld [vmem:[%s634 + $0x4] sm:%s627]
        %639 = vst [vmem:[%s635 + $0x8] sm:%s627] %v638
      $region292: #{_mask_prob_impl.1} parent=286 // loop_footer
        %s633 = sadd.s32 1, %s629
      $region293: #{_mask_prob_impl.1} parent=286 // loop_footer_branch
        %628 = sbr.rel target = $region289
      $region294: #{_mask_prob_impl.1} parent=286 // loop_exit
        _
    $region287: #{_mask_prob_impl.1} parent=248 // pred_fallthru
      _
    // Predicated region
    $region306: #{_mask_prob_impl.1} parent=248 // pred_check
      _
    $region307: #{_mask_prob_impl.1} parent=248 // pred_check_branch
      %665 = sbr.rel (0) target = $region309
    $region308: #{_mask_prob_impl.1} parent=248 // pred_region
      %666 = vsyncadd %s618, 32
    $region309: #{_mask_prob_impl.1} parent=248 // pred_fallthru
      _
    %s667 = sadd.s32 %s542, 2
    %p668 = scmp.lt.s32.totalorder %s667, 5
    %s669 = scalar_select %p668, %s667, 5
    %s670 = sld [smem:[#allocation5 + %s669]]
    %s671 = sshrl.u32 %s670, 2
    %s672 = sand.u32 %s670, 3
    %s673 = smul.u32 %s671, 8
    %s674 = sadd.s32 %s672, %s673
    %s675 = smul.u32 %s669, 8
    %s676 = sadd.s32 %s674, %s675
    %s677 = scalar_lea.vmem %s1, %s676
    %s678 = sadd.s32 2, %s553
    %s679 = scalar_lea.vmem [#allocation2], %s678
    %s680 = sadd.s32 %s541, 4
    %s681 = scalar_lea.sflag [#allocation3], %s680
    %p683 = scmp.lt.u32.totalorder 1, 8
    %p684 = pneg %p683
    // Predicated region
    $region310: #{_mask_prob_impl.1} parent=248 // pred_check
      _
    $region311: #{_mask_prob_impl.1} parent=248 // pred_check_branch
      %686 = sbr.rel (%p683) target = $region313
    $region312: #{_mask_prob_impl.1} parent=248 // pred_region
      %s703 = sand.u32 1, 7
      %p704 = scmp.eq.s32.totalorder %s703, 0
      %p705 = pneg %p704
      // Predicated region
      $region325: #{_mask_prob_impl.1} parent=312 // pred_check
        _
      $region326: #{_mask_prob_impl.1} parent=312 // pred_check_branch
        %707 = sbr.rel (%p704) target = $region328
      $region327: #{_mask_prob_impl.1} parent=312 // pred_region
        %s708 = sand.u32 1, 7
        %s709 = ssub.s32 1, %s708
        %s710 = scalar_lea.vmem %s677, %s709
        %s711 = ssub.s32 1, %s708
        %s712 = scalar_lea.vmem %s679, %s711 [#allocation2]
        %s713 = sshllo.u32 0, %s708
        loop: start=0, step=1, limit=1
        $region329: #{_mask_prob_impl.1} parent=327 // loop_pre_header
          _
        $region330: #{_mask_prob_impl.1} parent=327 // loop_header
          %s715 = sphi 0, %s719
          %p716 = scmp.ge.s32.totalorder %s715, 1
          %s720 = sphi %s710, %s710
          %s721 = sphi %s712, %s712
        $region331: #{_mask_prob_impl.1} parent=327 // loop_header_branch
          %718 = sbr.rel (%p716) target = $region335
        $region332: #{_mask_prob_impl.1} parent=327 // loop_body
          %v722 = vld [vmem:[%s720] sm:%s713]
          %723 = vst [vmem:[%s721] sm:%s713] %v722
          %v724 = vld [vmem:[%s720 + $0x4] sm:%s713]
          %725 = vst [vmem:[%s721 + $0x8] sm:%s713] %v724
        $region333: #{_mask_prob_impl.1} parent=327 // loop_footer
          %s719 = sadd.s32 1, %s715
        $region334: #{_mask_prob_impl.1} parent=327 // loop_footer_branch
          %714 = sbr.rel target = $region330
        $region335: #{_mask_prob_impl.1} parent=327 // loop_exit
          _
      $region328: #{_mask_prob_impl.1} parent=312 // pred_fallthru
        _
    $region313: #{_mask_prob_impl.1} parent=248 // pred_fallthru
      _
    // Predicated region
    $region314: #{_mask_prob_impl.1} parent=248 // pred_check
      %p687 = pneg %p683
    $region315: #{_mask_prob_impl.1} parent=248 // pred_check_branch
      %689 = sbr.rel (%p687) target = $region317
    $region316: #{_mask_prob_impl.1} parent=248 // pred_region
      %s690 = sshllo.u32 0, 1
      loop: start=0, step=1, limit=1
      $region318: #{_mask_prob_impl.1} parent=316 // loop_pre_header
        _
      $region319: #{_mask_prob_impl.1} parent=316 // loop_header
        %s692 = sphi 0, %s696
        %p693 = scmp.ge.s32.totalorder %s692, 1
        %s697 = sphi %s677, %s677
        %s698 = sphi %s679, %s679
      $region320: #{_mask_prob_impl.1} parent=316 // loop_header_branch
        %695 = sbr.rel (%p693) target = $region324
      $region321: #{_mask_prob_impl.1} parent=316 // loop_body
        %v699 = vld [vmem:[%s697] sm:%s690]
        %700 = vst [vmem:[%s698] sm:%s690] %v699
        %v701 = vld [vmem:[%s697 + $0x4] sm:%s690]
        %702 = vst [vmem:[%s698 + $0x8] sm:%s690] %v701
      $region322: #{_mask_prob_impl.1} parent=316 // loop_footer
        %s696 = sadd.s32 1, %s692
      $region323: #{_mask_prob_impl.1} parent=316 // loop_footer_branch
        %691 = sbr.rel target = $region319
      $region324: #{_mask_prob_impl.1} parent=316 // loop_exit
        _
    $region317: #{_mask_prob_impl.1} parent=248 // pred_fallthru
      _
    // Predicated region
    $region336: #{_mask_prob_impl.1} parent=248 // pred_check
      _
    $region337: #{_mask_prob_impl.1} parent=248 // pred_check_branch
      %728 = sbr.rel (0) target = $region339
    $region338: #{_mask_prob_impl.1} parent=248 // pred_region
      %729 = vsyncadd %s681, 32
    $region339: #{_mask_prob_impl.1} parent=248 // pred_fallthru
      _
    %s730 = sadd.s32 %s542, 3
    %p731 = scmp.lt.s32.totalorder %s730, 5
    %s732 = scalar_select %p731, %s730, 5
    %s733 = sld [smem:[#allocation5 + %s732]]
    %s734 = sshrl.u32 %s733, 2
    %s735 = sand.u32 %s733, 3
    %s736 = smul.u32 %s734, 8
    %s737 = sadd.s32 %s735, %s736
    %s738 = smul.u32 %s732, 8
    %s739 = sadd.s32 %s737, %s738
    %s740 = scalar_lea.vmem %s1, %s739
    %s741 = sadd.s32 3, %s553
    %s742 = scalar_lea.vmem [#allocation2], %s741
    %s743 = sadd.s32 %s541, 6
    %s744 = scalar_lea.sflag [#allocation3], %s743
    %p746 = scmp.lt.u32.totalorder 1, 8
    %p747 = pneg %p746
    // Predicated region
    $region340: #{_mask_prob_impl.1} parent=248 // pred_check
      _
    $region341: #{_mask_prob_impl.1} parent=248 // pred_check_branch
      %749 = sbr.rel (%p746) target = $region343
    $region342: #{_mask_prob_impl.1} parent=248 // pred_region
      %s766 = sand.u32 1, 7
      %p767 = scmp.eq.s32.totalorder %s766, 0
      %p768 = pneg %p767
      // Predicated region
      $region355: #{_mask_prob_impl.1} parent=342 // pred_check
        _
      $region356: #{_mask_prob_impl.1} parent=342 // pred_check_branch
        %770 = sbr.rel (%p767) target = $region358
      $region357: #{_mask_prob_impl.1} parent=342 // pred_region
        %s771 = sand.u32 1, 7
        %s772 = ssub.s32 1, %s771
        %s773 = scalar_lea.vmem %s740, %s772
        %s774 = ssub.s32 1, %s771
        %s775 = scalar_lea.vmem %s742, %s774 [#allocation2]
        %s776 = sshllo.u32 0, %s771
        loop: start=0, step=1, limit=1
        $region359: #{_mask_prob_impl.1} parent=357 // loop_pre_header
          _
        $region360: #{_mask_prob_impl.1} parent=357 // loop_header
          %s778 = sphi 0, %s782
          %p779 = scmp.ge.s32.totalorder %s778, 1
          %s783 = sphi %s773, %s773
          %s784 = sphi %s775, %s775
        $region361: #{_mask_prob_impl.1} parent=357 // loop_header_branch
          %781 = sbr.rel (%p779) target = $region365
        $region362: #{_mask_prob_impl.1} parent=357 // loop_body
          %v785 = vld [vmem:[%s783] sm:%s776]
          %786 = vst [vmem:[%s784] sm:%s776] %v785
          %v787 = vld [vmem:[%s783 + $0x4] sm:%s776]
          %788 = vst [vmem:[%s784 + $0x8] sm:%s776] %v787
        $region363: #{_mask_prob_impl.1} parent=357 // loop_footer
          %s782 = sadd.s32 1, %s778
        $region364: #{_mask_prob_impl.1} parent=357 // loop_footer_branch
          %777 = sbr.rel target = $region360
        $region365: #{_mask_prob_impl.1} parent=357 // loop_exit
          _
      $region358: #{_mask_prob_impl.1} parent=342 // pred_fallthru
        _
    $region343: #{_mask_prob_impl.1} parent=248 // pred_fallthru
      _
    // Predicated region
    $region344: #{_mask_prob_impl.1} parent=248 // pred_check
      %p750 = pneg %p746
    $region345: #{_mask_prob_impl.1} parent=248 // pred_check_branch
      %752 = sbr.rel (%p750) target = $region347
    $region346: #{_mask_prob_impl.1} parent=248 // pred_region
      %s753 = sshllo.u32 0, 1
      loop: start=0, step=1, limit=1
      $region348: #{_mask_prob_impl.1} parent=346 // loop_pre_header
        _
      $region349: #{_mask_prob_impl.1} parent=346 // loop_header
        %s755 = sphi 0, %s759
        %p756 = scmp.ge.s32.totalorder %s755, 1
        %s760 = sphi %s740, %s740
        %s761 = sphi %s742, %s742
      $region350: #{_mask_prob_impl.1} parent=346 // loop_header_branch
        %758 = sbr.rel (%p756) target = $region354
      $region351: #{_mask_prob_impl.1} parent=346 // loop_body
        %v762 = vld [vmem:[%s760] sm:%s753]
        %763 = vst [vmem:[%s761] sm:%s753] %v762
        %v764 = vld [vmem:[%s760 + $0x4] sm:%s753]
        %765 = vst [vmem:[%s761 + $0x8] sm:%s753] %v764
      $region352: #{_mask_prob_impl.1} parent=346 // loop_footer
        %s759 = sadd.s32 1, %s755
      $region353: #{_mask_prob_impl.1} parent=346 // loop_footer_branch
        %754 = sbr.rel target = $region349
      $region354: #{_mask_prob_impl.1} parent=346 // loop_exit
        _
    $region347: #{_mask_prob_impl.1} parent=248 // pred_fallthru
      _
    // Predicated region
    $region366: #{_mask_prob_impl.1} parent=248 // pred_check
      _
    $region367: #{_mask_prob_impl.1} parent=248 // pred_check_branch
      %791 = sbr.rel (0) target = $region369
    $region368: #{_mask_prob_impl.1} parent=248 // pred_region
      %792 = vsyncadd %s744, 32
    $region369: #{_mask_prob_impl.1} parent=248 // pred_fallthru
      _
    %s793 = sadd.s32 %s542, 4
    %p794 = scmp.lt.s32.totalorder %s793, 5
    %s795 = scalar_select %p794, %s793, 5
    %s796 = sld [smem:[#allocation5 + %s795]]
    %s797 = sshrl.u32 %s796, 2
    %s798 = sand.u32 %s796, 3
    %s799 = smul.u32 %s797, 8
    %s800 = sadd.s32 %s798, %s799
    %s801 = smul.u32 %s795, 8
    %s802 = sadd.s32 %s800, %s801
    %s803 = scalar_lea.vmem %s1, %s802
    %s804 = sadd.s32 4, %s553
    %s805 = scalar_lea.vmem [#allocation2], %s804
    %s806 = sadd.s32 %s541, 8
    %s807 = scalar_lea.sflag [#allocation3], %s806
    %p809 = scmp.lt.u32.totalorder 1, 8
    %p810 = pneg %p809
    // Predicated region
    $region370: #{_mask_prob_impl.1} parent=248 // pred_check
      _
    $region371: #{_mask_prob_impl.1} parent=248 // pred_check_branch
      %812 = sbr.rel (%p809) target = $region373
    $region372: #{_mask_prob_impl.1} parent=248 // pred_region
      %s829 = sand.u32 1, 7
      %p830 = scmp.eq.s32.totalorder %s829, 0
      %p831 = pneg %p830
      // Predicated region
      $region385: #{_mask_prob_impl.1} parent=372 // pred_check
        _
      $region386: #{_mask_prob_impl.1} parent=372 // pred_check_branch
        %833 = sbr.rel (%p830) target = $region388
      $region387: #{_mask_prob_impl.1} parent=372 // pred_region
        %s834 = sand.u32 1, 7
        %s835 = ssub.s32 1, %s834
        %s836 = scalar_lea.vmem %s803, %s835
        %s837 = ssub.s32 1, %s834
        %s838 = scalar_lea.vmem %s805, %s837 [#allocation2]
        %s839 = sshllo.u32 0, %s834
        loop: start=0, step=1, limit=1
        $region389: #{_mask_prob_impl.1} parent=387 // loop_pre_header
          _
        $region390: #{_mask_prob_impl.1} parent=387 // loop_header
          %s841 = sphi 0, %s845
          %p842 = scmp.ge.s32.totalorder %s841, 1
          %s846 = sphi %s836, %s836
          %s847 = sphi %s838, %s838
        $region391: #{_mask_prob_impl.1} parent=387 // loop_header_branch
          %844 = sbr.rel (%p842) target = $region395
        $region392: #{_mask_prob_impl.1} parent=387 // loop_body
          %v848 = vld [vmem:[%s846] sm:%s839]
          %849 = vst [vmem:[%s847] sm:%s839] %v848
          %v850 = vld [vmem:[%s846 + $0x4] sm:%s839]
          %851 = vst [vmem:[%s847 + $0x8] sm:%s839] %v850
        $region393: #{_mask_prob_impl.1} parent=387 // loop_footer
          %s845 = sadd.s32 1, %s841
        $region394: #{_mask_prob_impl.1} parent=387 // loop_footer_branch
          %840 = sbr.rel target = $region390
        $region395: #{_mask_prob_impl.1} parent=387 // loop_exit
          _
      $region388: #{_mask_prob_impl.1} parent=372 // pred_fallthru
        _
    $region373: #{_mask_prob_impl.1} parent=248 // pred_fallthru
      _
    // Predicated region
    $region374: #{_mask_prob_impl.1} parent=248 // pred_check
      %p813 = pneg %p809
    $region375: #{_mask_prob_impl.1} parent=248 // pred_check_branch
      %815 = sbr.rel (%p813) target = $region377
    $region376: #{_mask_prob_impl.1} parent=248 // pred_region
      %s816 = sshllo.u32 0, 1
      loop: start=0, step=1, limit=1
      $region378: #{_mask_prob_impl.1} parent=376 // loop_pre_header
        _
      $region379: #{_mask_prob_impl.1} parent=376 // loop_header
        %s818 = sphi 0, %s822
        %p819 = scmp.ge.s32.totalorder %s818, 1
        %s823 = sphi %s803, %s803
        %s824 = sphi %s805, %s805
      $region380: #{_mask_prob_impl.1} parent=376 // loop_header_branch
        %821 = sbr.rel (%p819) target = $region384
      $region381: #{_mask_prob_impl.1} parent=376 // loop_body
        %v825 = vld [vmem:[%s823] sm:%s816]
        %826 = vst [vmem:[%s824] sm:%s816] %v825
        %v827 = vld [vmem:[%s823 + $0x4] sm:%s816]
        %828 = vst [vmem:[%s824 + $0x8] sm:%s816] %v827
      $region382: #{_mask_prob_impl.1} parent=376 // loop_footer
        %s822 = sadd.s32 1, %s818
      $region383: #{_mask_prob_impl.1} parent=376 // loop_footer_branch
        %817 = sbr.rel target = $region379
      $region384: #{_mask_prob_impl.1} parent=376 // loop_exit
        _
    $region377: #{_mask_prob_impl.1} parent=248 // pred_fallthru
      _
    // Predicated region
    $region396: #{_mask_prob_impl.1} parent=248 // pred_check
      _
    $region397: #{_mask_prob_impl.1} parent=248 // pred_check_branch
      %854 = sbr.rel (0) target = $region399
    $region398: #{_mask_prob_impl.1} parent=248 // pred_region
      %855 = vsyncadd %s807, 32
    $region399: #{_mask_prob_impl.1} parent=248 // pred_fallthru
      _
    %s856 = sadd.s32 %s542, 5
    %p857 = scmp.lt.s32.totalorder %s856, 5
    %s858 = scalar_select %p857, %s856, 5
    %s859 = sld [smem:[#allocation5 + %s858]]
    %s860 = sshrl.u32 %s859, 2
    %s861 = sand.u32 %s859, 3
    %s862 = smul.u32 %s860, 8
    %s863 = sadd.s32 %s861, %s862
    %s864 = smul.u32 %s858, 8
    %s865 = sadd.s32 %s863, %s864
    %s866 = scalar_lea.vmem %s1, %s865
    %s867 = sadd.s32 5, %s553
    %s868 = scalar_lea.vmem [#allocation2], %s867
    %s869 = sadd.s32 %s541, 10
    %s870 = scalar_lea.sflag [#allocation3], %s869
    %p872 = scmp.lt.u32.totalorder 1, 8
    %p873 = pneg %p872
    // Predicated region
    $region400: #{_mask_prob_impl.1} parent=248 // pred_check
      _
    $region401: #{_mask_prob_impl.1} parent=248 // pred_check_branch
      %875 = sbr.rel (%p872) target = $region403
    $region402: #{_mask_prob_impl.1} parent=248 // pred_region
      %s892 = sand.u32 1, 7
      %p893 = scmp.eq.s32.totalorder %s892, 0
      %p894 = pneg %p893
      // Predicated region
      $region415: #{_mask_prob_impl.1} parent=402 // pred_check
        _
      $region416: #{_mask_prob_impl.1} parent=402 // pred_check_branch
        %896 = sbr.rel (%p893) target = $region418
      $region417: #{_mask_prob_impl.1} parent=402 // pred_region
        %s897 = sand.u32 1, 7
        %s898 = ssub.s32 1, %s897
        %s899 = scalar_lea.vmem %s866, %s898
        %s900 = ssub.s32 1, %s897
        %s901 = scalar_lea.vmem %s868, %s900 [#allocation2]
        %s902 = sshllo.u32 0, %s897
        loop: start=0, step=1, limit=1
        $region419: #{_mask_prob_impl.1} parent=417 // loop_pre_header
          _
        $region420: #{_mask_prob_impl.1} parent=417 // loop_header
          %s904 = sphi 0, %s908
          %p905 = scmp.ge.s32.totalorder %s904, 1
          %s909 = sphi %s899, %s899
          %s910 = sphi %s901, %s901
        $region421: #{_mask_prob_impl.1} parent=417 // loop_header_branch
          %907 = sbr.rel (%p905) target = $region425
        $region422: #{_mask_prob_impl.1} parent=417 // loop_body
          %v911 = vld [vmem:[%s909] sm:%s902]
          %912 = vst [vmem:[%s910] sm:%s902] %v911
          %v913 = vld [vmem:[%s909 + $0x4] sm:%s902]
          %914 = vst [vmem:[%s910 + $0x8] sm:%s902] %v913
        $region423: #{_mask_prob_impl.1} parent=417 // loop_footer
          %s908 = sadd.s32 1, %s904
        $region424: #{_mask_prob_impl.1} parent=417 // loop_footer_branch
          %903 = sbr.rel target = $region420
        $region425: #{_mask_prob_impl.1} parent=417 // loop_exit
          _
      $region418: #{_mask_prob_impl.1} parent=402 // pred_fallthru
        _
    $region403: #{_mask_prob_impl.1} parent=248 // pred_fallthru
      _
    // Predicated region
    $region404: #{_mask_prob_impl.1} parent=248 // pred_check
      %p876 = pneg %p872
    $region405: #{_mask_prob_impl.1} parent=248 // pred_check_branch
      %878 = sbr.rel (%p876) target = $region407
    $region406: #{_mask_prob_impl.1} parent=248 // pred_region
      %s879 = sshllo.u32 0, 1
      loop: start=0, step=1, limit=1
      $region408: #{_mask_prob_impl.1} parent=406 // loop_pre_header
        _
      $region409: #{_mask_prob_impl.1} parent=406 // loop_header
        %s881 = sphi 0, %s885
        %p882 = scmp.ge.s32.totalorder %s881, 1
        %s886 = sphi %s866, %s866
        %s887 = sphi %s868, %s868
      $region410: #{_mask_prob_impl.1} parent=406 // loop_header_branch
        %884 = sbr.rel (%p882) target = $region414
      $region411: #{_mask_prob_impl.1} parent=406 // loop_body
        %v888 = vld [vmem:[%s886] sm:%s879]
        %889 = vst [vmem:[%s887] sm:%s879] %v888
        %v890 = vld [vmem:[%s886 + $0x4] sm:%s879]
        %891 = vst [vmem:[%s887 + $0x8] sm:%s879] %v890
      $region412: #{_mask_prob_impl.1} parent=406 // loop_footer
        %s885 = sadd.s32 1, %s881
      $region413: #{_mask_prob_impl.1} parent=406 // loop_footer_branch
        %880 = sbr.rel target = $region409
      $region414: #{_mask_prob_impl.1} parent=406 // loop_exit
        _
    $region407: #{_mask_prob_impl.1} parent=248 // pred_fallthru
      _
    // Predicated region
    $region426: #{_mask_prob_impl.1} parent=248 // pred_check
      _
    $region427: #{_mask_prob_impl.1} parent=248 // pred_check_branch
      %917 = sbr.rel (0) target = $region429
    $region428: #{_mask_prob_impl.1} parent=248 // pred_region
      %918 = vsyncadd %s870, 32
    $region429: #{_mask_prob_impl.1} parent=248 // pred_fallthru
      _
    %s919 = sadd.s32 %s542, 6
    %p920 = scmp.lt.s32.totalorder %s919, 5
    %s921 = scalar_select %p920, %s919, 5
    %s922 = sld [smem:[#allocation5 + %s921]]
    %s923 = sshrl.u32 %s922, 2
    %s924 = sand.u32 %s922, 3
    %s925 = smul.u32 %s923, 8
    %s926 = sadd.s32 %s924, %s925
    %s927 = smul.u32 %s921, 8
    %s928 = sadd.s32 %s926, %s927
    %s929 = scalar_lea.vmem %s1, %s928
    %s930 = sadd.s32 6, %s553
    %s931 = scalar_lea.vmem [#allocation2], %s930
    %s932 = sadd.s32 %s541, 12
    %s933 = scalar_lea.sflag [#allocation3], %s932
    %p935 = scmp.lt.u32.totalorder 1, 8
    %p936 = pneg %p935
    // Predicated region
    $region430: #{_mask_prob_impl.1} parent=248 // pred_check
      _
    $region431: #{_mask_prob_impl.1} parent=248 // pred_check_branch
      %938 = sbr.rel (%p935) target = $region433
    $region432: #{_mask_prob_impl.1} parent=248 // pred_region
      %s955 = sand.u32 1, 7
      %p956 = scmp.eq.s32.totalorder %s955, 0
      %p957 = pneg %p956
      // Predicated region
      $region445: #{_mask_prob_impl.1} parent=432 // pred_check
        _
      $region446: #{_mask_prob_impl.1} parent=432 // pred_check_branch
        %959 = sbr.rel (%p956) target = $region448
      $region447: #{_mask_prob_impl.1} parent=432 // pred_region
        %s960 = sand.u32 1, 7
        %s961 = ssub.s32 1, %s960
        %s962 = scalar_lea.vmem %s929, %s961
        %s963 = ssub.s32 1, %s960
        %s964 = scalar_lea.vmem %s931, %s963 [#allocation2]
        %s965 = sshllo.u32 0, %s960
        loop: start=0, step=1, limit=1
        $region449: #{_mask_prob_impl.1} parent=447 // loop_pre_header
          _
        $region450: #{_mask_prob_impl.1} parent=447 // loop_header
          %s967 = sphi 0, %s971
          %p968 = scmp.ge.s32.totalorder %s967, 1
          %s972 = sphi %s962, %s962
          %s973 = sphi %s964, %s964
        $region451: #{_mask_prob_impl.1} parent=447 // loop_header_branch
          %970 = sbr.rel (%p968) target = $region455
        $region452: #{_mask_prob_impl.1} parent=447 // loop_body
          %v974 = vld [vmem:[%s972] sm:%s965]
          %975 = vst [vmem:[%s973] sm:%s965] %v974
          %v976 = vld [vmem:[%s972 + $0x4] sm:%s965]
          %977 = vst [vmem:[%s973 + $0x8] sm:%s965] %v976
        $region453: #{_mask_prob_impl.1} parent=447 // loop_footer
          %s971 = sadd.s32 1, %s967
        $region454: #{_mask_prob_impl.1} parent=447 // loop_footer_branch
          %966 = sbr.rel target = $region450
        $region455: #{_mask_prob_impl.1} parent=447 // loop_exit
          _
      $region448: #{_mask_prob_impl.1} parent=432 // pred_fallthru
        _
    $region433: #{_mask_prob_impl.1} parent=248 // pred_fallthru
      _
    // Predicated region
    $region434: #{_mask_prob_impl.1} parent=248 // pred_check
      %p939 = pneg %p935
    $region435: #{_mask_prob_impl.1} parent=248 // pred_check_branch
      %941 = sbr.rel (%p939) target = $region437
    $region436: #{_mask_prob_impl.1} parent=248 // pred_region
      %s942 = sshllo.u32 0, 1
      loop: start=0, step=1, limit=1
      $region438: #{_mask_prob_impl.1} parent=436 // loop_pre_header
        _
      $region439: #{_mask_prob_impl.1} parent=436 // loop_header
        %s944 = sphi 0, %s948
        %p945 = scmp.ge.s32.totalorder %s944, 1
        %s949 = sphi %s929, %s929
        %s950 = sphi %s931, %s931
      $region440: #{_mask_prob_impl.1} parent=436 // loop_header_branch
        %947 = sbr.rel (%p945) target = $region444
      $region441: #{_mask_prob_impl.1} parent=436 // loop_body
        %v951 = vld [vmem:[%s949] sm:%s942]
        %952 = vst [vmem:[%s950] sm:%s942] %v951
        %v953 = vld [vmem:[%s949 + $0x4] sm:%s942]
        %954 = vst [vmem:[%s950 + $0x8] sm:%s942] %v953
      $region442: #{_mask_prob_impl.1} parent=436 // loop_footer
        %s948 = sadd.s32 1, %s944
      $region443: #{_mask_prob_impl.1} parent=436 // loop_footer_branch
        %943 = sbr.rel target = $region439
      $region444: #{_mask_prob_impl.1} parent=436 // loop_exit
        _
    $region437: #{_mask_prob_impl.1} parent=248 // pred_fallthru
      _
    // Predicated region
    $region456: #{_mask_prob_impl.1} parent=248 // pred_check
      _
    $region457: #{_mask_prob_impl.1} parent=248 // pred_check_branch
      %980 = sbr.rel (0) target = $region459
    $region458: #{_mask_prob_impl.1} parent=248 // pred_region
      %981 = vsyncadd %s933, 32
    $region459: #{_mask_prob_impl.1} parent=248 // pred_fallthru
      _
    %s982 = sadd.s32 %s542, 7
    %p983 = scmp.lt.s32.totalorder %s982, 5
    %s984 = scalar_select %p983, %s982, 5
    %s985 = sld [smem:[#allocation5 + %s984]]
    %s986 = sshrl.u32 %s985, 2
    %s987 = sand.u32 %s985, 3
    %s988 = smul.u32 %s986, 8
    %s989 = sadd.s32 %s987, %s988
    %s990 = smul.u32 %s984, 8
    %s991 = sadd.s32 %s989, %s990
    %s992 = scalar_lea.vmem %s1, %s991
    %s993 = sadd.s32 7, %s553
    %s994 = scalar_lea.vmem [#allocation2], %s993
    %s995 = sadd.s32 %s541, 14
    %s996 = scalar_lea.sflag [#allocation3], %s995
    %p998 = scmp.lt.u32.totalorder 1, 8
    %p999 = pneg %p998
    // Predicated region
    $region460: #{_mask_prob_impl.1} parent=248 // pred_check
      _
    $region461: #{_mask_prob_impl.1} parent=248 // pred_check_branch
      %1001 = sbr.rel (%p998) target = $region463
    $region462: #{_mask_prob_impl.1} parent=248 // pred_region
      %s1018 = sand.u32 1, 7
      %p1019 = scmp.eq.s32.totalorder %s1018, 0
      %p1020 = pneg %p1019
      // Predicated region
      $region475: #{_mask_prob_impl.1} parent=462 // pred_check
        _
      $region476: #{_mask_prob_impl.1} parent=462 // pred_check_branch
        %1022 = sbr.rel (%p1019) target = $region478
      $region477: #{_mask_prob_impl.1} parent=462 // pred_region
        %s1023 = sand.u32 1, 7
        %s1024 = ssub.s32 1, %s1023
        %s1025 = scalar_lea.vmem %s992, %s1024
        %s1026 = ssub.s32 1, %s1023
        %s1027 = scalar_lea.vmem %s994, %s1026 [#allocation2]
        %s1028 = sshllo.u32 0, %s1023
        loop: start=0, step=1, limit=1
        $region479: #{_mask_prob_impl.1} parent=477 // loop_pre_header
          _
        $region480: #{_mask_prob_impl.1} parent=477 // loop_header
          %s1030 = sphi 0, %s1034
          %p1031 = scmp.ge.s32.totalorder %s1030, 1
          %s1035 = sphi %s1025, %s1025
          %s1036 = sphi %s1027, %s1027
        $region481: #{_mask_prob_impl.1} parent=477 // loop_header_branch
          %1033 = sbr.rel (%p1031) target = $region485
        $region482: #{_mask_prob_impl.1} parent=477 // loop_body
          %v1037 = vld [vmem:[%s1035] sm:%s1028]
          %1038 = vst [vmem:[%s1036] sm:%s1028] %v1037
          %v1039 = vld [vmem:[%s1035 + $0x4] sm:%s1028]
          %1040 = vst [vmem:[%s1036 + $0x8] sm:%s1028] %v1039
        $region483: #{_mask_prob_impl.1} parent=477 // loop_footer
          %s1034 = sadd.s32 1, %s1030
        $region484: #{_mask_prob_impl.1} parent=477 // loop_footer_branch
          %1029 = sbr.rel target = $region480
        $region485: #{_mask_prob_impl.1} parent=477 // loop_exit
          _
      $region478: #{_mask_prob_impl.1} parent=462 // pred_fallthru
        _
    $region463: #{_mask_prob_impl.1} parent=248 // pred_fallthru
      _
    // Predicated region
    $region464: #{_mask_prob_impl.1} parent=248 // pred_check
      %p1002 = pneg %p998
    $region465: #{_mask_prob_impl.1} parent=248 // pred_check_branch
      %1004 = sbr.rel (%p1002) target = $region467
    $region466: #{_mask_prob_impl.1} parent=248 // pred_region
      %s1005 = sshllo.u32 0, 1
      loop: start=0, step=1, limit=1
      $region468: #{_mask_prob_impl.1} parent=466 // loop_pre_header
        _
      $region469: #{_mask_prob_impl.1} parent=466 // loop_header
        %s1007 = sphi 0, %s1011
        %p1008 = scmp.ge.s32.totalorder %s1007, 1
        %s1012 = sphi %s992, %s992
        %s1013 = sphi %s994, %s994
      $region470: #{_mask_prob_impl.1} parent=466 // loop_header_branch
        %1010 = sbr.rel (%p1008) target = $region474
      $region471: #{_mask_prob_impl.1} parent=466 // loop_body
        %v1014 = vld [vmem:[%s1012] sm:%s1005]
        %1015 = vst [vmem:[%s1013] sm:%s1005] %v1014
        %v1016 = vld [vmem:[%s1012 + $0x4] sm:%s1005]
        %1017 = vst [vmem:[%s1013 + $0x8] sm:%s1005] %v1016
      $region472: #{_mask_prob_impl.1} parent=466 // loop_footer
        %s1011 = sadd.s32 1, %s1007
      $region473: #{_mask_prob_impl.1} parent=466 // loop_footer_branch
        %1006 = sbr.rel target = $region469
      $region474: #{_mask_prob_impl.1} parent=466 // loop_exit
        _
    $region467: #{_mask_prob_impl.1} parent=248 // pred_fallthru
      _
    // Predicated region
    $region486: #{_mask_prob_impl.1} parent=248 // pred_check
      _
    $region487: #{_mask_prob_impl.1} parent=248 // pred_check_branch
      %1043 = sbr.rel (0) target = $region489
    $region488: #{_mask_prob_impl.1} parent=248 // pred_region
      %1044 = vsyncadd %s996, 32
    $region489: #{_mask_prob_impl.1} parent=248 // pred_fallthru
      _
  $region249: #{_mask_prob_impl.1} parent=0 // pred_fallthru
    _
  %s1045 = scalar_lea.sflag [#allocation3], %s27
  %s1046 = smul.u32 1, 2
  %s1047 = sshll.u32 %s1046, 4
  %1048 = dma.done %s1045, %s1047
  %s1049 = sadd.s32 %s27, 2
  %s1050 = scalar_lea.sflag [#allocation3], %s1049
  %s1051 = sshll.u32 %s1046, 4
  %1052 = dma.done %s1050, %s1051
  %s1053 = sadd.s32 %s27, 4
  %s1054 = scalar_lea.sflag [#allocation3], %s1053
  %s1055 = sshll.u32 %s1046, 4
  %1056 = dma.done %s1054, %s1055
  %s1057 = sadd.s32 %s27, 6
  %s1058 = scalar_lea.sflag [#allocation3], %s1057
  %s1059 = sshll.u32 %s1046, 4
  %1060 = dma.done %s1058, %s1059
  %s1061 = sadd.s32 %s27, 8
  %s1062 = scalar_lea.sflag [#allocation3], %s1061
  %s1063 = sshll.u32 %s1046, 4
  %1064 = dma.done %s1062, %s1063
  %s1065 = sadd.s32 %s27, 10
  %s1066 = scalar_lea.sflag [#allocation3], %s1065
  %s1067 = sshll.u32 %s1046, 4
  %1068 = dma.done %s1066, %s1067
  %s1069 = sadd.s32 %s27, 12
  %s1070 = scalar_lea.sflag [#allocation3], %s1069
  %s1071 = sshll.u32 %s1046, 4
  %1072 = dma.done %s1070, %s1071
  %s1073 = sadd.s32 %s27, 14
  %s1074 = scalar_lea.sflag [#allocation3], %s1073
  %s1075 = sshll.u32 %s1046, 4
  %1076 = dma.done %s1074, %s1075
  %s1077 = smul.u32 %s27, 2
  %s1078 = smul.addr %s1077, 8
  %s1079 = scalar_lea.vmem [#allocation2], %s1078
  %v1080 = vld [vmem:[%s1079] sm:$0xff]
  %v1081 = vld [vmem:[%s1079 + $0x8] sm:$0xff]
  %v1082 = vmul.f32 %v1080, 0.5
  %v1083 = vmul.f32 %v1081, 0.5
  %v1084 = vtanh.pop %v1082
  %v1085 = vtanh.pop %v1083
  %v1086 = vmul.f32 %v1084, 0.5
  %v1087 = vmul.f32 %v1085, 0.5
  %v1088 = vadd.f32 %v1086, 0.5
  %v1089 = vadd.f32 %v1087, 0.5
  %1090 = vst [vmem:[%s24] sm:$0xff] %v1088
  %1091 = vst [vmem:[%s24 + $0x8] sm:$0xff] %v1089
  %s1092 = sadd.s32 0, 0
  %p1093 = scmp.lt.s32.totalorder %s1092, 0
  %s1094 = scalar_select %p1093, %s1092, 0
  %s1095 = smul.addr %s1094, 2
  %s1096 = smul.addr %s1095, 8
  %s1097 = scalar_lea.vmem %s2, %s1096
  // Predicated region
  $region490: #{_mask_prob_impl.1} parent=0 // pred_check
    _
  $region491: #{_mask_prob_impl.1} parent=0 // pred_check_branch
    %1099 = sbr.rel (0) target = $region493
  $region492: #{_mask_prob_impl.1} parent=0 // pred_region
    %s1100 = sadd.s32 0, 0
  $region493: #{_mask_prob_impl.1} parent=0 // pred_fallthru
    _
  // Predicated region
  $region494: #{_mask_prob_impl.1} parent=0 // pred_check
    _
  $region495: #{_mask_prob_impl.1} parent=0 // pred_check_branch
    %1102 = sbr.rel (0) target = $region497
  $region496: #{_mask_prob_impl.1} parent=0 // pred_region
    %s1103 = sadd.s32 0, 0
    %p1104 = scmp.lt.s32.totalorder %s1103, 0
    %s1105 = scalar_select %p1104, %s1103, 0
    %s1106 = smul.addr %s1105, 2
    %s1107 = smul.addr %s1106, 8
    %s1108 = scalar_lea.vmem %s2, %s1107
  $region497: #{_mask_prob_impl.1} parent=0 // pred_fallthru
    _
  %1109 = vsyncmov [#allocation3]
  %s1110 = vpop.sfrf %1109
  %p1111 = scmp.eq.s32.totalorder %s1110, 0
  %p1112 = pneg %p1111
  %1114 = shalt.err (%p1112)
  %s1115 = scalar_lea.sflag [#allocation3], 1
  %1116 = vsyncmov %s1115
  %s1117 = vpop.sfrf %1116
  %p1118 = scmp.eq.s32.totalorder %s1117, 0
  %p1119 = pneg %p1118
  %1121 = shalt.err (%p1119)
  %s1122 = scalar_lea.sflag [#allocation3], 2
  %1123 = vsyncmov %s1122
  %s1124 = vpop.sfrf %1123
  %p1125 = scmp.eq.s32.totalorder %s1124, 0
  %p1126 = pneg %p1125
  %1128 = shalt.err (%p1126)
  %s1129 = scalar_lea.sflag [#allocation3], 3
  %1130 = vsyncmov %s1129
  %s1131 = vpop.sfrf %1130
  %p1132 = scmp.eq.s32.totalorder %s1131, 0
  %p1133 = pneg %p1132
  %1135 = shalt.err (%p1133)
  %s1136 = scalar_lea.sflag [#allocation3], 4
  %1137 = vsyncmov %s1136
  %s1138 = vpop.sfrf %1137
  %p1139 = scmp.eq.s32.totalorder %s1138, 0
  %p1140 = pneg %p1139
  %1142 = shalt.err (%p1140)
  %s1143 = scalar_lea.sflag [#allocation3], 5
  %1144 = vsyncmov %s1143
  %s1145 = vpop.sfrf %1144
  %p1146 = scmp.eq.s32.totalorder %s1145, 0
  %p1147 = pneg %p1146
  %1149 = shalt.err (%p1147)
  %s1150 = scalar_lea.sflag [#allocation3], 6
  %1151 = vsyncmov %s1150
  %s1152 = vpop.sfrf %1151
  %p1153 = scmp.eq.s32.totalorder %s1152, 0
  %p1154 = pneg %p1153
  %1156 = shalt.err (%p1154)
  %s1157 = scalar_lea.sflag [#allocation3], 7
  %1158 = vsyncmov %s1157
  %s1159 = vpop.sfrf %1158
  %p1160 = scmp.eq.s32.totalorder %s1159, 0
  %p1161 = pneg %p1160
  %1163 = shalt.err (%p1161)
  %s1164 = scalar_lea.sflag [#allocation3], 8
  %1165 = vsyncmov %s1164
  %s1166 = vpop.sfrf %1165
  %p1167 = scmp.eq.s32.totalorder %s1166, 0
  %p1168 = pneg %p1167
  %1170 = shalt.err (%p1168)
  %s1171 = scalar_lea.sflag [#allocation3], 9
  %1172 = vsyncmov %s1171
  %s1173 = vpop.sfrf %1172
  %p1174 = scmp.eq.s32.totalorder %s1173, 0
  %p1175 = pneg %p1174
  %1177 = shalt.err (%p1175)
  %s1178 = scalar_lea.sflag [#allocation3], 10
  %1179 = vsyncmov %s1178
  %s1180 = vpop.sfrf %1179
  %p1181 = scmp.eq.s32.totalorder %s1180, 0
  %p1182 = pneg %p1181
  %1184 = shalt.err (%p1182)
  %s1185 = scalar_lea.sflag [#allocation3], 11
  %1186 = vsyncmov %s1185
  %s1187 = vpop.sfrf %1186
  %p1188 = scmp.eq.s32.totalorder %s1187, 0
  %p1189 = pneg %p1188
  %1191 = shalt.err (%p1189)
  %s1192 = scalar_lea.sflag [#allocation3], 12
  %1193 = vsyncmov %s1192
  %s1194 = vpop.sfrf %1193
  %p1195 = scmp.eq.s32.totalorder %s1194, 0
  %p1196 = pneg %p1195
  %1198 = shalt.err (%p1196)
  %s1199 = scalar_lea.sflag [#allocation3], 13
  %1200 = vsyncmov %s1199
  %s1201 = vpop.sfrf %1200
  %p1202 = scmp.eq.s32.totalorder %s1201, 0
  %p1203 = pneg %p1202
  %1205 = shalt.err (%p1203)
  %s1206 = scalar_lea.sflag [#allocation3], 14
  %1207 = vsyncmov %s1206
  %s1208 = vpop.sfrf %1207
  %p1209 = scmp.eq.s32.totalorder %s1208, 0
  %p1210 = pneg %p1209
  %1212 = shalt.err (%p1210)
  %s1213 = scalar_lea.sflag [#allocation3], 15
  %1214 = vsyncmov %s1213
  %s1215 = vpop.sfrf %1214
  %p1216 = scmp.eq.s32.totalorder %s1215, 0
  %p1217 = pneg %p1216
  %1219 = shalt.err (%p1217)

</llo_original>
